<compile_context>
chip_gen: v7x
topology: tpu7x:2x2x1
jax: 0.10.0
libtpu: 0.0.40
codegen_flags: <defaults>
</compile_context>

<pallas_src>
import numpy as np
import jax
import jax.numpy as jnp
from jax.experimental import pallas as pl
from jax.experimental.pallas import tpu as pltpu


# ----------------------------- Pallas kernel ------------------------------- #

def _temporal_block_kernel(x_ref, wc_ref, wv_ref, sel_ref, o_ref):
    f32 = jnp.float32
    x = x_ref[0].astype(f32)                      # (C, BT) — one batch chunk, lane-dense
    C, BT = x.shape
    BTh = BT // 2

    WC = wc_ref[...].astype(f32)                  # (12C, C)  conv weights, row-stacked taps
    WV = wv_ref[...].astype(f32)                  # (C, 5C+13) 1x1 weights + per-ch vectors
    SEL = sel_ref[...].astype(f32)                # (BT, 3BT + 3BTh) packed constants

    s_right = SEL[:, 0:BT]                        # (A@s_right)[:,t] = A[:,t-1], 0 at t=0
    s_left = SEL[:, BT:2 * BT]                    # (A@s_left)[:,t]  = A[:,t+1], 0 at t=T-1
    p_full = SEL[:, 2 * BT:3 * BT]                # per-sample temporal mean, replicated
    avg_m = SEL[:, 3 * BT:3 * BT + BTh]           # AvgPool1d(2,2)
    sub_m = SEL[:, 3 * BT + BTh:3 * BT + 2 * BTh]                 # stride-2 pick
    p_half = SEL[:BTh, 3 * BT + 2 * BTh:3 * BT + 3 * BTh]         # mean on the half slab

    def wmat(i):                                  # (C, C) 1x1-style weight i
        return WV[:, i * C:(i + 1) * C]

    def vcol(i):                                  # (C, 1) per-channel vector i
        return WV[:, 5 * C + i:5 * C + i + 1]

    def conv3(h, slot):
        # Conv1d(k=3, padding=1, bias=False): one K-stacked channel matmul,
        # then combine the three taps with precomputed shift matrices.
        z = jnp.dot(WC[slot * 3 * C:(slot + 1) * 3 * C, :], h,
                    preferred_element_type=f32)                    # (3C, BT)
        return (jnp.dot(z[0:C], s_right, preferred_element_type=f32)
                + z[C:2 * C]
                + jnp.dot(z[2 * C:3 * C], s_left, preferred_element_type=f32))

    def se(y, w1, b1, w2, b2, pool_m):
        # sigmoid(W2 @ relu(W1 @ mean_T(y) + b1) + b2) * y, lane-dense throughout
        pool = jnp.dot(y, pool_m, preferred_element_type=f32)      # per-sample mean, tiled
        s1 = jnp.maximum(jnp.dot(w1, pool, preferred_element_type=f32) + b1, 0.0)
        s2 = jax.nn.sigmoid(jnp.dot(w2, s1, preferred_element_type=f32) + b2)
        return y * s2

    # ---------------- layer 1: SEBasicBlock, stride = 1 ----------------
    h = jnp.maximum(x * vcol(0) + vcol(1), 0.0)          # relu(bn1(x))   (BN folded)
    out = conv3(h, 0)                                    # conv1
    h = jnp.maximum(out * vcol(2) + vcol(3), 0.0)        # relu(bn2(.))
    out = conv3(h, 1)                                    # conv2 (stride 1)
    out = se(out, wmat(0), vcol(4), wmat(1), vcol(5), p_full)
    x1 = out + x                                         # residual, (C, BT)

    # ---------------- layer 2: SEBasicBlock, stride = 2 ----------------
    # identity = BN(Conv1x1(AvgPool(x1)))  (BN folded into the 1x1 conv)
    identity = jnp.dot(wmat(4), jnp.dot(x1, avg_m, preferred_element_type=f32),
                       preferred_element_type=f32) + vcol(12)      # (C, BTh)
    h = jnp.maximum(x1 * vcol(6) + vcol(7), 0.0)         # relu(bn1(x1))
    out = conv3(h, 2)                                    # conv1 (stride 1)
    h = jnp.maximum(out * vcol(8) + vcol(9), 0.0)        # relu(bn2(.))
    out = jnp.dot(conv3(h, 3), sub_m, preferred_element_type=f32)  # conv2, stride 2
    out = se(out, wmat(2), vcol(10), wmat(3), vcol(11), p_half)
    o_ref[0] = (out + identity).astype(o_ref.dtype)


# ------------------------- hoisted constant builder ------------------------- #

def _build_selection_constants(Bc, T):
    """Packed (BT, 3*BT + 3*BTh) grid-invariant selection matrices (numpy)."""
    Th = T // 2
    BT, BTh = Bc * T, Bc * Th
    col = np.arange(BT)
    b_of, t_of = col // T, col % T
    jcol = np.arange(BTh)
    bh, th = jcol // Th, jcol % Th

    r, c = col[:, None], col[None, :]
    # (A @ s_right)[:, c] = A[:, c-1] (0 at the first time step of each sample)
    s_right = ((c == r + 1) & (t_of[None, :] != 0)).astype(np.float32)
    # (A @ s_left)[:, c]  = A[:, c+1] (0 at the last time step of each sample)
    s_left = ((c == r - 1) & (t_of[None, :] != T - 1)).astype(np.float32)
    # per-sample temporal mean replicated across that sample's lanes
    p_full = (b_of[:, None] == b_of[None, :]).astype(np.float32) / T
    # AvgPool1d(kernel=2, stride=2) and stride-2 subsample (conv2 stride 2)
    avg = ((b_of[:, None] == bh[None, :]) &
           ((t_of[:, None] == 2 * th[None, :]) |
            (t_of[:, None] == 2 * th[None, :] + 1))).astype(np.float32) * 0.5
    sub = ((b_of[:, None] == bh[None, :]) &
           (t_of[:, None] == 2 * th[None, :])).astype(np.float32)
    # per-sample mean on the half-length slab (rows >= BTh are unused padding)
    p_half = np.zeros((BT, BTh), np.float32)
    p_half[:BTh] = (bh[:, None] == bh[None, :]).astype(np.float32) / Th

    return jnp.asarray(np.concatenate([s_right, s_left, p_full, avg, sub, p_half],
                                      axis=1))


# ------------------------------ JAX wrapper -------------------------------- #

def _fold_bn(gamma, beta, mean, var, eps=1e-5):
    scale = gamma / jnp.sqrt(var + eps)
    return scale, beta - mean * scale


def temporal_block_forward(x, params, *, num_chunks=None):
    """x: (B, C, T), T even.  Returns (B, C, T // 2)."""
    B, C, T = x.shape
    assert T % 2 == 0
    Th = T // 2
    f32 = jnp.float32

    # Grid policy: whole batch per step for lane density (v5e/v6e single TC);
    # split into 2 "parallel" chunks for v7x's dual TCs only when each chunk
    # already fills >= 128 lanes.
    if num_chunks is None:
        min_per_chunk = pl.cdiv(128, T)
        num_chunks = 2 if (B % 2 == 0 and (B // 2) >= min_per_chunk) else 1
    assert B % num_chunks == 0
    Bc = B // num_chunks
    BT, BTh = Bc * T, Bc * Th

    p1, p2 = params["layer1"], params["layer2"]

    def conv_rows(w):                     # (C, C, 3) -> (3C, C): [W0; W1; W2]
        return jnp.concatenate([w[:, :, 0], w[:, :, 1], w[:, :, 2]], axis=0)

    bn11s, bn11b = _fold_bn(p1["bn1_g"], p1["bn1_b"], p1["bn1_m"], p1["bn1_v"])
    bn12s, bn12b = _fold_bn(p1["bn2_g"], p1["bn2_b"], p1["bn2_m"], p1["bn2_v"])
    bn21s, bn21b = _fold_bn(p2["bn1_g"], p2["bn1_b"], p2["bn1_m"], p2["bn1_v"])
    bn22s, bn22b = _fold_bn(p2["bn2_g"], p2["bn2_b"], p2["bn2_m"], p2["bn2_v"])
    # downsample: fold its BatchNorm into the 1x1 conv
    dns, dnb = _fold_bn(p2["dn_bn_g"], p2["dn_bn_b"], p2["dn_bn_m"], p2["dn_bn_v"])
    w_dn = p2["dn_w"] * dns[:, None]
    b_dn = dns * p2["dn_b"] + dnb

    wc = jnp.concatenate([conv_rows(p1["conv1_w"]), conv_rows(p1["conv2_w"]),
                          conv_rows(p2["conv1_w"]), conv_rows(p2["conv2_w"])],
                         axis=0).astype(f32)                          # (12C, C)
    vecs = jnp.stack([bn11s, bn11b, bn12s, bn12b, p1["se1_b"], p1["se2_b"],
                      bn21s, bn21b, bn22s, bn22b, p2["se1_b"], p2["se2_b"], b_dn],
                     axis=1)                                          # (C, 13)
    wv = jnp.concatenate([p1["se1_w"], p1["se2_w"], p2["se1_w"], p2["se2_w"],
                          w_dn, vecs], axis=1).astype(f32)            # (C, 5C + 13)

    sel = _build_selection_constants(Bc, T)                           # (BT, 3BT + 3BTh)

    # (B, C, T) -> (num_chunks, C, Bc*T), sample-major / time-minor along lanes
    x_slab = x.reshape(num_chunks, Bc, C, T).transpose(0, 2, 1, 3).reshape(
        num_chunks, C, BT)

    out = pl.pallas_call(
        _temporal_block_kernel,
        out_shape=jax.ShapeDtypeStruct((num_chunks, C, BTh), x.dtype),
        grid_spec=pltpu.PrefetchScalarGridSpec(
            num_scalar_prefetch=0,
            grid=(num_chunks,),
            in_specs=[
                pl.BlockSpec((1, C, BT), lambda g: (g, 0, 0)),        # activations
                pl.BlockSpec((12 * C, C), lambda g: (0, 0)),          # conv weights
                pl.BlockSpec((C, 5 * C + 13), lambda g: (0, 0)),      # 1x1 weights + vecs
                pl.BlockSpec((BT, 3 * BT + 3 * BTh), lambda g: (0, 0)),  # selection consts
            ],
            out_specs=pl.BlockSpec((1, C, BTh), lambda g: (g, 0, 0)),
        ),
        compiler_params=pltpu.CompilerParams(
            dimension_semantics=("parallel",)),
    )(x_slab, wc, wv, sel)

    # (num_chunks, C, Bc*Th) -> (B, C, Th)
    return out.reshape(num_chunks, C, Bc, Th).transpose(0, 2, 1, 3).reshape(B, C, Th)


# ---------------------------- pure-JAX reference ---------------------------- #

def _bn_eval(x, g, b, m, v, eps=1e-5):
    scale = g / jnp.sqrt(v + eps)
    shift = b - m * scale
    return x * scale[None, :, None] + shift[None, :, None]


def _conv1d(x, w, stride):
    return jax.lax.conv_general_dilated(
        x, w, window_strides=(stride,), padding=((1, 1),),
        dimension_numbers=("NCH", "OIH", "NCH"))


def _se_basic_block_ref(x, p, stride):
    identity = x
    if stride != 1:
        B, C, T = x.shape
        a = x.reshape(B, C, T // 2, 2).mean(-1)                       # AvgPool1d(2,2)
        a = jnp.einsum("oi,bit->bot", p["dn_w"], a) + p["dn_b"][None, :, None]
        identity = _bn_eval(a, p["dn_bn_g"], p["dn_bn_b"], p["dn_bn_m"], p["dn_bn_v"])
    out = _conv1d(jax.nn.relu(_bn_eval(x, p["bn1_g"], p["bn1_b"], p["bn1_m"], p["bn1_v"])),
                  p["conv1_w"], 1)
    out = _conv1d(jax.nn.relu(_bn_eval(out, p["bn2_g"], p["bn2_b"], p["bn2_m"], p["bn2_v"])),
                  p["conv2_w"], stride)
    pool = out.mean(-1)                                               # (B, C)
    s1 = jax.nn.relu(pool @ p["se1_w"].T + p["se1_b"])
    s2 = jax.nn.sigmoid(s1 @ p["se2_w"].T + p["se2_b"])
    out = out * s2[:, :, None]
    return out + identity


def temporal_block_reference(x, params):
    out = _se_basic_block_ref(x, params["layer1"], stride=1)
    out = _se_basic_block_ref(out, params["layer2"], stride=2)
    return out


# ---------------------------------- main ------------------------------------ #

if __name__ == "__main__":
    B, C, T = 2, 32, 16          # batch, inplanes, temporal_length

    key = jax.random.PRNGKey(0)

    def bn_params(keys, C):
        return dict(g=1.0 + 0.1 * jax.random.normal(keys[0], (C,), jnp.float32),
                    b=0.1 * jax.random.normal(keys[1], (C,), jnp.float32),
                    m=0.1 * jax.random.normal(keys[2], (C,), jnp.float32),
                    v=0.5 + jnp.abs(jax.random.normal(keys[3], (C,), jnp.float32)))

    def make_layer(k, C, with_dn):
        ks = jax.random.split(k, 20)
        bn1, bn2 = bn_params(ks[0:4], C), bn_params(ks[4:8], C)
        p = {
            "conv1_w": 0.1 * jax.random.normal(ks[8], (C, C, 3), jnp.float32),
            "conv2_w": 0.1 * jax.random.normal(ks[9], (C, C, 3), jnp.float32),
            "se1_w": 0.2 * jax.random.normal(ks[10], (C, C), jnp.float32),
            "se1_b": 0.1 * jax.random.normal(ks[11], (C,), jnp.float32),
            "se2_w": 0.2 * jax.random.normal(ks[12], (C, C), jnp.float32),
            "se2_b": 0.1 * jax.random.normal(ks[13], (C,), jnp.float32),
            "bn1_g": bn1["g"], "bn1_b": bn1["b"], "bn1_m": bn1["m"], "bn1_v": bn1["v"],
            "bn2_g": bn2["g"], "bn2_b": bn2["b"], "bn2_m": bn2["m"], "bn2_v": bn2["v"],
        }
        if with_dn:
            dbn = bn_params(ks[14:18], C)
            p.update({
                "dn_w": 0.2 * jax.random.normal(ks[18], (C, C), jnp.float32),
                "dn_b": 0.1 * jax.random.normal(ks[19], (C,), jnp.float32),
                "dn_bn_g": dbn["g"], "dn_bn_b": dbn["b"],
                "dn_bn_m": dbn["m"], "dn_bn_v": dbn["v"],
            })
        return p

    k1, k2, kx = jax.random.split(key, 3)
    params = {"layer1": make_layer(k1, C, False), "layer2": make_layer(k2, C, True)}
    x = jax.random.normal(kx, (B, C, T), jnp.float32)

    out = jax.block_until_ready(temporal_block_forward(x, params))
    ref = jax.block_until_ready(temporal_block_reference(x, params))

    assert out.shape == (B, C, T // 2), out.shape
    max_err = float(jnp.max(jnp.abs(out - ref)))
    assert jnp.allclose(out, ref, atol=1e-3, rtol=1e-3), f"mismatch, max_err={max_err}"
    print("KERNEL_OK")
</pallas_src>

<mosaic_0001>
module attributes {stable_mosaic.version = 11 : i64} {
  func.func @_temporal_block_kernel(%arg0: i32, %arg1: memref<1x32x32xf32, #tpu.memory_space<vmem>>, %arg2: memref<384x32xf32, #tpu.memory_space<vmem>>, %arg3: memref<32x173xf32, #tpu.memory_space<vmem>>, %arg4: memref<32x144xf32, #tpu.memory_space<vmem>>, %arg5: memref<1x32x16xf32, #tpu.memory_space<vmem>>) attributes {dimension_semantics = [#tpu.dimension_semantics<parallel>], iteration_bounds = array<i64: 1>, scalar_prefetch = 0 : i64, scratch_operands = 0 : i64, tpu.core_type = #tpu.core_type<tc>, window_params = [{transform_indices = @transform_0, window_bounds = array<i64: 1, 32, 32>}, {pipeline_mode = #tpu.pipeline_mode<synchronous>, transform_indices = @transform_1, window_bounds = array<i64: 384, 32>}, {pipeline_mode = #tpu.pipeline_mode<synchronous>, transform_indices = @transform_2, window_bounds = array<i64: 32, 173>}, {pipeline_mode = #tpu.pipeline_mode<synchronous>, transform_indices = @transform_3, window_bounds = array<i64: 32, 144>}, {transform_indices = @transform_4, window_bounds = array<i64: 1, 32, 16>}]} {
    %c0 = arith.constant 0 : index
    %c0_0 = arith.constant 0 : index
    %c0_1 = arith.constant 0 : index
    %0 = vector.load %arg1[%c0, %c0_0, %c0_1] : memref<1x32x32xf32, #tpu.memory_space<vmem>>, vector<1x32x32xf32>
    %1 = vector.shape_cast %0 : vector<1x32x32xf32> to vector<32x32xf32>
    %c0_2 = arith.constant 0 : index
    %c0_3 = arith.constant 0 : index
    %2 = vector.load %arg2[%c0_2, %c0_3] : memref<384x32xf32, #tpu.memory_space<vmem>>, vector<384x32xf32>
    %c0_4 = arith.constant 0 : index
    %c0_5 = arith.constant 0 : index
    %3 = vector.load %arg3[%c0_4, %c0_5] : memref<32x173xf32, #tpu.memory_space<vmem>>, vector<32x173xf32>
    %c0_6 = arith.constant 0 : index
    %c0_7 = arith.constant 0 : index
    %4 = vector.load %arg4[%c0_6, %c0_7] : memref<32x144xf32, #tpu.memory_space<vmem>>, vector<32x144xf32>
    %5 = vector.extract_strided_slice %4 {offsets = [0, 0], sizes = [32, 32], strides = [1, 1]} : vector<32x144xf32> to vector<32x32xf32>
    %6 = vector.extract_strided_slice %4 {offsets = [0, 32], sizes = [32, 32], strides = [1, 1]} : vector<32x144xf32> to vector<32x32xf32>
    %7 = vector.extract_strided_slice %4 {offsets = [0, 64], sizes = [32, 32], strides = [1, 1]} : vector<32x144xf32> to vector<32x32xf32>
    %8 = vector.extract_strided_slice %4 {offsets = [0, 96], sizes = [32, 16], strides = [1, 1]} : vector<32x144xf32> to vector<32x16xf32>
    %9 = vector.extract_strided_slice %4 {offsets = [0, 112], sizes = [32, 16], strides = [1, 1]} : vector<32x144xf32> to vector<32x16xf32>
    %10 = vector.extract_strided_slice %4 {offsets = [0, 128], sizes = [16, 16], strides = [1, 1]} : vector<32x144xf32> to vector<16x16xf32>
    %11 = vector.extract_strided_slice %3 {offsets = [0, 160], sizes = [32, 1], strides = [1, 1]} : vector<32x173xf32> to vector<32x1xf32>
    %12 = vector.broadcast %11 : vector<32x1xf32> to vector<32x32xf32>
    %13 = arith.mulf %1, %12 : vector<32x32xf32>
    %14 = vector.extract_strided_slice %3 {offsets = [0, 161], sizes = [32, 1], strides = [1, 1]} : vector<32x173xf32> to vector<32x1xf32>
    %15 = vector.broadcast %14 : vector<32x1xf32> to vector<32x32xf32>
    %16 = arith.addf %13, %15 : vector<32x32xf32>
    %cst = arith.constant 0.000000e+00 : f32
    %17 = vector.broadcast %cst : f32 to vector<32x32xf32>
    %18 = arith.maximumf %16, %17 : vector<32x32xf32>
    %19 = vector.extract_strided_slice %2 {offsets = [0, 0], sizes = [96, 32], strides = [1, 1]} : vector<384x32xf32> to vector<96x32xf32>
    %cst_8 = arith.constant dense<0.000000e+00> : vector<96x32xf32>
    %20 = tpu.matmul %19, %18, %cst_8 {dimension_numbers = #tpu.dot_dimension_numbers<[1], [0], [0], [1], [0, 0, 1, 1], [], []>} : vector<96x32xf32>, vector<32x32xf32>, vector<96x32xf32> -> vector<96x32xf32>
    %21 = vector.extract_strided_slice %20 {offsets = [0, 0], sizes = [32, 32], strides = [1, 1]} : vector<96x32xf32> to vector<32x32xf32>
    %cst_9 = arith.constant dense<0.000000e+00> : vector<32x32xf32>
    %22 = tpu.matmul %21, %5, %cst_9 {dimension_numbers = #tpu.dot_dimension_numbers<[1], [0], [0], [1], [0, 0, 1, 1], [], []>} : vector<32x32xf32>, vector<32x32xf32>, vector<32x32xf32> -> vector<32x32xf32>
    %23 = vector.extract_strided_slice %20 {offsets = [32, 0], sizes = [32, 32], strides = [1, 1]} : vector<96x32xf32> to vector<32x32xf32>
    %24 = arith.addf %22, %23 : vector<32x32xf32>
    %25 = vector.extract_strided_slice %20 {offsets = [64, 0], sizes = [32, 32], strides = [1, 1]} : vector<96x32xf32> to vector<32x32xf32>
    %cst_10 = arith.constant dense<0.000000e+00> : vector<32x32xf32>
    %26 = tpu.matmul %25, %6, %cst_10 {dimension_numbers = #tpu.dot_dimension_numbers<[1], [0], [0], [1], [0, 0, 1, 1], [], []>} : vector<32x32xf32>, vector<32x32xf32>, vector<32x32xf32> -> vector<32x32xf32>
    %27 = arith.addf %24, %26 : vector<32x32xf32>
    %28 = vector.extract_strided_slice %3 {offsets = [0, 162], sizes = [32, 1], strides = [1, 1]} : vector<32x173xf32> to vector<32x1xf32>
    %29 = vector.broadcast %28 : vector<32x1xf32> to vector<32x32xf32>
    %30 = arith.mulf %27, %29 : vector<32x32xf32>
    %31 = vector.extract_strided_slice %3 {offsets = [0, 163], sizes = [32, 1], strides = [1, 1]} : vector<32x173xf32> to vector<32x1xf32>
    %32 = vector.broadcast %31 : vector<32x1xf32> to vector<32x32xf32>
    %33 = arith.addf %30, %32 : vector<32x32xf32>
    %cst_11 = arith.constant 0.000000e+00 : f32
    %34 = vector.broadcast %cst_11 : f32 to vector<32x32xf32>
    %35 = arith.maximumf %33, %34 : vector<32x32xf32>
    %36 = vector.extract_strided_slice %2 {offsets = [96, 0], sizes = [96, 32], strides = [1, 1]} : vector<384x32xf32> to vector<96x32xf32>
    %cst_12 = arith.constant dense<0.000000e+00> : vector<96x32xf32>
    %37 = tpu.matmul %36, %35, %cst_12 {dimension_numbers = #tpu.dot_dimension_numbers<[1], [0], [0], [1], [0, 0, 1, 1], [], []>} : vector<96x32xf32>, vector<32x32xf32>, vector<96x32xf32> -> vector<96x32xf32>
    %38 = vector.extract_strided_slice %37 {offsets = [0, 0], sizes = [32, 32], strides = [1, 1]} : vector<96x32xf32> to vector<32x32xf32>
    %cst_13 = arith.constant dense<0.000000e+00> : vector<32x32xf32>
    %39 = tpu.matmul %38, %5, %cst_13 {dimension_numbers = #tpu.dot_dimension_numbers<[1], [0], [0], [1], [0, 0, 1, 1], [], []>} : vector<32x32xf32>, vector<32x32xf32>, vector<32x32xf32> -> vector<32x32xf32>
    %40 = vector.extract_strided_slice %37 {offsets = [32, 0], sizes = [32, 32], strides = [1, 1]} : vector<96x32xf32> to vector<32x32xf32>
    %41 = arith.addf %39, %40 : vector<32x32xf32>
    %42 = vector.extract_strided_slice %37 {offsets = [64, 0], sizes = [32, 32], strides = [1, 1]} : vector<96x32xf32> to vector<32x32xf32>
    %cst_14 = arith.constant dense<0.000000e+00> : vector<32x32xf32>
    %43 = tpu.matmul %42, %6, %cst_14 {dimension_numbers = #tpu.dot_dimension_numbers<[1], [0], [0], [1], [0, 0, 1, 1], [], []>} : vector<32x32xf32>, vector<32x32xf32>, vector<32x32xf32> -> vector<32x32xf32>
    %44 = arith.addf %41, %43 : vector<32x32xf32>
    %45 = vector.extract_strided_slice %3 {offsets = [0, 0], sizes = [32, 32], strides = [1, 1]} : vector<32x173xf32> to vector<32x32xf32>
    %46 = vector.extract_strided_slice %3 {offsets = [0, 164], sizes = [32, 1], strides = [1, 1]} : vector<32x173xf32> to vector<32x1xf32>
    %47 = vector.extract_strided_slice %3 {offsets = [0, 32], sizes = [32, 32], strides = [1, 1]} : vector<32x173xf32> to vector<32x32xf32>
    %48 = vector.extract_strided_slice %3 {offsets = [0, 165], sizes = [32, 1], strides = [1, 1]} : vector<32x173xf32> to vector<32x1xf32>
    %cst_15 = arith.constant dense<0.000000e+00> : vector<32x32xf32>
    %49 = tpu.matmul %44, %7, %cst_15 {dimension_numbers = #tpu.dot_dimension_numbers<[1], [0], [0], [1], [0, 0, 1, 1], [], []>} : vector<32x32xf32>, vector<32x32xf32>, vector<32x32xf32> -> vector<32x32xf32>
    %cst_16 = arith.constant dense<0.000000e+00> : vector<32x32xf32>
    %50 = tpu.matmul %45, %49, %cst_16 {dimension_numbers = #tpu.dot_dimension_numbers<[1], [0], [0], [1], [0, 0, 1, 1], [], []>} : vector<32x32xf32>, vector<32x32xf32>, vector<32x32xf32> -> vector<32x32xf32>
    %51 = vector.broadcast %46 : vector<32x1xf32> to vector<32x32xf32>
    %52 = arith.addf %50, %51 : vector<32x32xf32>
    %cst_17 = arith.constant 0.000000e+00 : f32
    %53 = vector.broadcast %cst_17 : f32 to vector<32x32xf32>
    %54 = arith.maximumf %52, %53 : vector<32x32xf32>
    %cst_18 = arith.constant dense<0.000000e+00> : vector<32x32xf32>
    %55 = tpu.matmul %47, %54, %cst_18 {dimension_numbers = #tpu.dot_dimension_numbers<[1], [0], [0], [1], [0, 0, 1, 1], [], []>} : vector<32x32xf32>, vector<32x32xf32>, vector<32x32xf32> -> vector<32x32xf32>
    %56 = vector.broadcast %48 : vector<32x1xf32> to vector<32x32xf32>
    %57 = arith.addf %55, %56 : vector<32x32xf32>
    %58 = arith.negf %57 : vector<32x32xf32>
    %59 = math.exp %58 : vector<32x32xf32>
    %cst_19 = arith.constant 1.000000e+00 : f32
    %60 = vector.broadcast %cst_19 : f32 to vector<32x32xf32>
    %61 = arith.addf %60, %59 : vector<32x32xf32>
    %62 = arith.divf %60, %61 : vector<32x32xf32>
    %63 = arith.mulf %44, %62 : vector<32x32xf32>
    %64 = arith.addf %63, %1 : vector<32x32xf32>
    %65 = vector.extract_strided_slice %3 {offsets = [0, 128], sizes = [32, 32], strides = [1, 1]} : vector<32x173xf32> to vector<32x32xf32>
    %cst_20 = arith.constant dense<0.000000e+00> : vector<32x16xf32>
    %66 = tpu.matmul %64, %8, %cst_20 {dimension_numbers = #tpu.dot_dimension_numbers<[1], [0], [0], [1], [0, 0, 1, 1], [], []>} : vector<32x32xf32>, vector<32x16xf32>, vector<32x16xf32> -> vector<32x16xf32>
    %cst_21 = arith.constant dense<0.000000e+00> : vector<32x16xf32>
    %67 = tpu.matmul %65, %66, %cst_21 {dimension_numbers = #tpu.dot_dimension_numbers<[1], [0], [0], [1], [0, 0, 1, 1], [], []>} : vector<32x32xf32>, vector<32x16xf32>, vector<32x16xf32> -> vector<32x16xf32>
    %68 = vector.extract_strided_slice %3 {offsets = [0, 172], sizes = [32, 1], strides = [1, 1]} : vector<32x173xf32> to vector<32x1xf32>
    %69 = vector.broadcast %68 : vector<32x1xf32> to vector<32x16xf32>
    %70 = arith.addf %67, %69 : vector<32x16xf32>
    %71 = vector.extract_strided_slice %3 {offsets = [0, 166], sizes = [32, 1], strides = [1, 1]} : vector<32x173xf32> to vector<32x1xf32>
    %72 = vector.broadcast %71 : vector<32x1xf32> to vector<32x32xf32>
    %73 = arith.mulf %64, %72 : vector<32x32xf32>
    %74 = vector.extract_strided_slice %3 {offsets = [0, 167], sizes = [32, 1], strides = [1, 1]} : vector<32x173xf32> to vector<32x1xf32>
    %75 = vector.broadcast %74 : vector<32x1xf32> to vector<32x32xf32>
    %76 = arith.addf %73, %75 : vector<32x32xf32>
    %cst_22 = arith.constant 0.000000e+00 : f32
    %77 = vector.broadcast %cst_22 : f32 to vector<32x32xf32>
    %78 = arith.maximumf %76, %77 : vector<32x32xf32>
    %79 = vector.extract_strided_slice %2 {offsets = [192, 0], sizes = [96, 32], strides = [1, 1]} : vector<384x32xf32> to vector<96x32xf32>
    %cst_23 = arith.constant dense<0.000000e+00> : vector<96x32xf32>
    %80 = tpu.matmul %79, %78, %cst_23 {dimension_numbers = #tpu.dot_dimension_numbers<[1], [0], [0], [1], [0, 0, 1, 1], [], []>} : vector<96x32xf32>, vector<32x32xf32>, vector<96x32xf32> -> vector<96x32xf32>
    %81 = vector.extract_strided_slice %80 {offsets = [0, 0], sizes = [32, 32], strides = [1, 1]} : vector<96x32xf32> to vector<32x32xf32>
    %cst_24 = arith.constant dense<0.000000e+00> : vector<32x32xf32>
    %82 = tpu.matmul %81, %5, %cst_24 {dimension_numbers = #tpu.dot_dimension_numbers<[1], [0], [0], [1], [0, 0, 1, 1], [], []>} : vector<32x32xf32>, vector<32x32xf32>, vector<32x32xf32> -> vector<32x32xf32>
    %83 = vector.extract_strided_slice %80 {offsets = [32, 0], sizes = [32, 32], strides = [1, 1]} : vector<96x32xf32> to vector<32x32xf32>
    %84 = arith.addf %82, %83 : vector<32x32xf32>
    %85 = vector.extract_strided_slice %80 {offsets = [64, 0], sizes = [32, 32], strides = [1, 1]} : vector<96x32xf32> to vector<32x32xf32>
    %cst_25 = arith.constant dense<0.000000e+00> : vector<32x32xf32>
    %86 = tpu.matmul %85, %6, %cst_25 {dimension_numbers = #tpu.dot_dimension_numbers<[1], [0], [0], [1], [0, 0, 1, 1], [], []>} : vector<32x32xf32>, vector<32x32xf32>, vector<32x32xf32> -> vector<32x32xf32>
    %87 = arith.addf %84, %86 : vector<32x32xf32>
    %88 = vector.extract_strided_slice %3 {offsets = [0, 168], sizes = [32, 1], strides = [1, 1]} : vector<32x173xf32> to vector<32x1xf32>
    %89 = vector.broadcast %88 : vector<32x1xf32> to vector<32x32xf32>
    %90 = arith.mulf %87, %89 : vector<32x32xf32>
    %91 = vector.extract_strided_slice %3 {offsets = [0, 169], sizes = [32, 1], strides = [1, 1]} : vector<32x173xf32> to vector<32x1xf32>
    %92 = vector.broadcast %91 : vector<32x1xf32> to vector<32x32xf32>
    %93 = arith.addf %90, %92 : vector<32x32xf32>
    %cst_26 = arith.constant 0.000000e+00 : f32
    %94 = vector.broadcast %cst_26 : f32 to vector<32x32xf32>
    %95 = arith.maximumf %93, %94 : vector<32x32xf32>
    %96 = vector.extract_strided_slice %2 {offsets = [288, 0], sizes = [96, 32], strides = [1, 1]} : vector<384x32xf32> to vector<96x32xf32>
    %cst_27 = arith.constant dense<0.000000e+00> : vector<96x32xf32>
    %97 = tpu.matmul %96, %95, %cst_27 {dimension_numbers = #tpu.dot_dimension_numbers<[1], [0], [0], [1], [0, 0, 1, 1], [], []>} : vector<96x32xf32>, vector<32x32xf32>, vector<96x32xf32> -> vector<96x32xf32>
    %98 = vector.extract_strided_slice %97 {offsets = [0, 0], sizes = [32, 32], strides = [1, 1]} : vector<96x32xf32> to vector<32x32xf32>
    %cst_28 = arith.constant dense<0.000000e+00> : vector<32x32xf32>
    %99 = tpu.matmul %98, %5, %cst_28 {dimension_numbers = #tpu.dot_dimension_numbers<[1], [0], [0], [1], [0, 0, 1, 1], [], []>} : vector<32x32xf32>, vector<32x32xf32>, vector<32x32xf32> -> vector<32x32xf32>
    %100 = vector.extract_strided_slice %97 {offsets = [32, 0], sizes = [32, 32], strides = [1, 1]} : vector<96x32xf32> to vector<32x32xf32>
    %101 = arith.addf %99, %100 : vector<32x32xf32>
    %102 = vector.extract_strided_slice %97 {offsets = [64, 0], sizes = [32, 32], strides = [1, 1]} : vector<96x32xf32> to vector<32x32xf32>
    %cst_29 = arith.constant dense<0.000000e+00> : vector<32x32xf32>
    %103 = tpu.matmul %102, %6, %cst_29 {dimension_numbers = #tpu.dot_dimension_numbers<[1], [0], [0], [1], [0, 0, 1, 1], [], []>} : vector<32x32xf32>, vector<32x32xf32>, vector<32x32xf32> -> vector<32x32xf32>
    %104 = arith.addf %101, %103 : vector<32x32xf32>
    %cst_30 = arith.constant dense<0.000000e+00> : vector<32x16xf32>
    %105 = tpu.matmul %104, %9, %cst_30 {dimension_numbers = #tpu.dot_dimension_numbers<[1], [0], [0], [1], [0, 0, 1, 1], [], []>} : vector<32x32xf32>, vector<32x16xf32>, vector<32x16xf32> -> vector<32x16xf32>
    %106 = vector.extract_strided_slice %3 {offsets = [0, 64], sizes = [32, 32], strides = [1, 1]} : vector<32x173xf32> to vector<32x32xf32>
    %107 = vector.extract_strided_slice %3 {offsets = [0, 170], sizes = [32, 1], strides = [1, 1]} : vector<32x173xf32> to vector<32x1xf32>
    %108 = vector.extract_strided_slice %3 {offsets = [0, 96], sizes = [32, 32], strides = [1, 1]} : vector<32x173xf32> to vector<32x32xf32>
    %109 = vector.extract_strided_slice %3 {offsets = [0, 171], sizes = [32, 1], strides = [1, 1]} : vector<32x173xf32> to vector<32x1xf32>
    %cst_31 = arith.constant dense<0.000000e+00> : vector<32x16xf32>
    %110 = tpu.matmul %105, %10, %cst_31 {dimension_numbers = #tpu.dot_dimension_numbers<[1], [0], [0], [1], [0, 0, 1, 1], [], []>} : vector<32x16xf32>, vector<16x16xf32>, vector<32x16xf32> -> vector<32x16xf32>
    %cst_32 = arith.constant dense<0.000000e+00> : vector<32x16xf32>
    %111 = tpu.matmul %106, %110, %cst_32 {dimension_numbers = #tpu.dot_dimension_numbers<[1], [0], [0], [1], [0, 0, 1, 1], [], []>} : vector<32x32xf32>, vector<32x16xf32>, vector<32x16xf32> -> vector<32x16xf32>
    %112 = vector.broadcast %107 : vector<32x1xf32> to vector<32x16xf32>
    %113 = arith.addf %111, %112 : vector<32x16xf32>
    %cst_33 = arith.constant 0.000000e+00 : f32
    %114 = vector.broadcast %cst_33 : f32 to vector<32x16xf32>
    %115 = arith.maximumf %113, %114 : vector<32x16xf32>
    %cst_34 = arith.constant dense<0.000000e+00> : vector<32x16xf32>
    %116 = tpu.matmul %108, %115, %cst_34 {dimension_numbers = #tpu.dot_dimension_numbers<[1], [0], [0], [1], [0, 0, 1, 1], [], []>} : vector<32x32xf32>, vector<32x16xf32>, vector<32x16xf32> -> vector<32x16xf32>
    %117 = vector.broadcast %109 : vector<32x1xf32> to vector<32x16xf32>
    %118 = arith.addf %116, %117 : vector<32x16xf32>
    %119 = arith.negf %118 : vector<32x16xf32>
    %120 = math.exp %119 : vector<32x16xf32>
    %cst_35 = arith.constant 1.000000e+00 : f32
    %121 = vector.broadcast %cst_35 : f32 to vector<32x16xf32>
    %122 = arith.addf %121, %120 : vector<32x16xf32>
    %123 = arith.divf %121, %122 : vector<32x16xf32>
    %124 = arith.mulf %105, %123 : vector<32x16xf32>
    %125 = arith.addf %124, %70 : vector<32x16xf32>
    %c0_36 = arith.constant 0 : index
    %c0_37 = arith.constant 0 : index
    %c0_38 = arith.constant 0 : index
    %126 = vector.load %arg5[%c0_36, %c0_37, %c0_38] : memref<1x32x16xf32, #tpu.memory_space<vmem>>, vector<1x32x16xf32>
    %127 = vector.shape_cast %126 : vector<1x32x16xf32> to vector<32x16xf32>
    %128 = vector.shape_cast %125 : vector<32x16xf32> to vector<1x32x16xf32>
    tpu.vector_store %arg5[%c0_36, %c0_37, %c0_38], %128 {strides = array<i32>} : memref<1x32x16xf32, #tpu.memory_space<vmem>>, vector<1x32x16xf32>,
    return
  }
  func.func @transform_0(%arg0: i32) -> (i32, i32, i32) {
    %c0_i32 = arith.constant 0 : i32
    %c0_i32_0 = arith.constant 0 : i32
    %c0_i32_1 = arith.constant 0 : i32
    return %arg0, %c0_i32, %c0_i32_0 : i32, i32, i32
  }
  func.func @transform_1(%arg0: i32) -> (i32, i32) {
    %c0_i32 = arith.constant 0 : i32
    %c0_i32_0 = arith.constant 0 : i32
    %c0_i32_1 = arith.constant 0 : i32
    return %c0_i32, %c0_i32_0 : i32, i32
  }
  func.func @transform_2(%arg0: i32) -> (i32, i32) {
    %c0_i32 = arith.constant 0 : i32
    %c0_i32_0 = arith.constant 0 : i32
    %c0_i32_1 = arith.constant 0 : i32
    return %c0_i32, %c0_i32_0 : i32, i32
  }
  func.func @transform_3(%arg0: i32) -> (i32, i32) {
    %c0_i32 = arith.constant 0 : i32
    %c0_i32_0 = arith.constant 0 : i32
    %c0_i32_1 = arith.constant 0 : i32
    return %c0_i32, %c0_i32_0 : i32, i32
  }
  func.func @transform_4(%arg0: i32) -> (i32, i32, i32) {
    %c0_i32 = arith.constant 0 : i32
    %c0_i32_0 = arith.constant 0 : i32
    %c0_i32_1 = arith.constant 0 : i32
    return %arg0, %c0_i32, %c0_i32_0 : i32, i32, i32
  }
}

</mosaic_0001>

<llo_original>
// kernel: tpu_custom_call.1
$region0: #{tpu_custom_call.1}
  #allocation0 [shape = 'u32[]', space=smem, size = 0x4, offset = 0x4, fixed_abs, tag = 'smem constant byte address 0x4 - core index']
  #allocation1 [shape = 'u32[144,128]{1,0:T(1,128)}', space=vmem, size = 0x12000, scoped, tag = 'internal scratch']
  %s0 = inlined_call_operand.vmem [shape: f32[1,32,32], index: 0, kind: input, shape index: {}]
  %s1 = inlined_call_operand.vmem [shape: f32[384,32], index: 1, kind: input, shape index: {}]
  %s2 = inlined_call_operand.vmem [shape: f32[32,173], index: 2, kind: input, shape index: {}]
  %s3 = inlined_call_operand.vmem [shape: f32[32,144], index: 3, kind: input, shape index: {}]
  %s4 = inlined_call_operand.vmem [shape: f32[1,32,16], index: 4, kind: output, shape index: {}]
  %s5 = sld [smem:[#allocation0]]
  $region26: #{tpu_custom_call.1} parent=0
    _
  %s7 = ssub.s32 1, %s5
  %s8 = scalar_select 0, %s7, %s5
  // Predicated region
  $region2: #{tpu_custom_call.1} parent=0 // pred_check
    _
  $region3: #{tpu_custom_call.1} parent=0 // pred_check_branch
    %10 = sbr.rel (0) target = $region5
  $region4: #{tpu_custom_call.1} parent=0 // pred_region
    _
  $region5: #{tpu_custom_call.1} parent=0 // pred_fallthru
    _
  // Predicated region
  $region6: #{tpu_custom_call.1} parent=0 // pred_check
    _
  $region7: #{tpu_custom_call.1} parent=0 // pred_check_branch
    %12 = sbr.rel (0) target = $region9
  $region8: #{tpu_custom_call.1} parent=0 // pred_region
    _
  $region9: #{tpu_custom_call.1} parent=0 // pred_fallthru
    _
  // Predicated region
  $region10: #{tpu_custom_call.1} parent=0 // pred_check
    _
  $region11: #{tpu_custom_call.1} parent=0 // pred_check_branch
    %14 = sbr.rel (0) target = $region13
  $region12: #{tpu_custom_call.1} parent=0 // pred_region
    _
  $region13: #{tpu_custom_call.1} parent=0 // pred_fallthru
    _
  // Predicated region
  $region14: #{tpu_custom_call.1} parent=0 // pred_check
    _
  $region15: #{tpu_custom_call.1} parent=0 // pred_check_branch
    %16 = sbr.rel (0) target = $region17
  $region16: #{tpu_custom_call.1} parent=0 // pred_region
    _
  $region17: #{tpu_custom_call.1} parent=0 // pred_fallthru
    _
  %v17 = vld [vmem:[%s0] sm:$0xff]
  %v18 = vld [vmem:[%s0 + $0x8] sm:$0xff]
  %v19 = vld [vmem:[%s0 + $0x10] sm:$0xff]
  %v20 = vld [vmem:[%s0 + $0x18] sm:$0xff]
  %v21 = vld [vmem:[%s1] sm:$0xff]
  %v22 = vld [vmem:[%s1 + $0x8] sm:$0xff]
  %v23 = vld [vmem:[%s1 + $0x10] sm:$0xff]
  %v24 = vld [vmem:[%s1 + $0x18] sm:$0xff]
  %v25 = vld [vmem:[%s1 + $0x20] sm:$0xff]
  %v26 = vld [vmem:[%s1 + $0x28] sm:$0xff]
  %v27 = vld [vmem:[%s1 + $0x30] sm:$0xff]
  %v28 = vld [vmem:[%s1 + $0x38] sm:$0xff]
  %v29 = vld [vmem:[%s1 + $0x40] sm:$0xff]
  %v30 = vld [vmem:[%s1 + $0x48] sm:$0xff]
  %v31 = vld [vmem:[%s1 + $0x50] sm:$0xff]
  %v32 = vld [vmem:[%s1 + $0x58] sm:$0xff]
  %v33 = vld [vmem:[%s1 + $0x60] sm:$0xff]
  %v34 = vld [vmem:[%s1 + $0x68] sm:$0xff]
  %v35 = vld [vmem:[%s1 + $0x70] sm:$0xff]
  %v36 = vld [vmem:[%s1 + $0x78] sm:$0xff]
  %v37 = vld [vmem:[%s1 + $0x80] sm:$0xff]
  %v38 = vld [vmem:[%s1 + $0x88] sm:$0xff]
  %v39 = vld [vmem:[%s1 + $0x90] sm:$0xff]
  %v40 = vld [vmem:[%s1 + $0x98] sm:$0xff]
  %v41 = vld [vmem:[%s1 + $0xa0] sm:$0xff]
  %v42 = vld [vmem:[%s1 + $0xa8] sm:$0xff]
  %v43 = vld [vmem:[%s1 + $0xb0] sm:$0xff]
  %v44 = vld [vmem:[%s1 + $0xb8] sm:$0xff]
  %v45 = vld [vmem:[%s1 + $0xc0] sm:$0xff]
  %v46 = vld [vmem:[%s1 + $0xc8] sm:$0xff]
  %v47 = vld [vmem:[%s1 + $0xd0] sm:$0xff]
  %v48 = vld [vmem:[%s1 + $0xd8] sm:$0xff]
  %v49 = vld [vmem:[%s1 + $0xe0] sm:$0xff]
  %v50 = vld [vmem:[%s1 + $0xe8] sm:$0xff]
  %v51 = vld [vmem:[%s1 + $0xf0] sm:$0xff]
  %v52 = vld [vmem:[%s1 + $0xf8] sm:$0xff]
  %v53 = vld [vmem:[%s1 + $0x100] sm:$0xff]
  %v54 = vld [vmem:[%s1 + $0x108] sm:$0xff]
  %v55 = vld [vmem:[%s1 + $0x110] sm:$0xff]
  %v56 = vld [vmem:[%s1 + $0x118] sm:$0xff]
  %v57 = vld [vmem:[%s1 + $0x120] sm:$0xff]
  %v58 = vld [vmem:[%s1 + $0x128] sm:$0xff]
  %v59 = vld [vmem:[%s1 + $0x130] sm:$0xff]
  %v60 = vld [vmem:[%s1 + $0x138] sm:$0xff]
  %v61 = vld [vmem:[%s1 + $0x140] sm:$0xff]
  %v62 = vld [vmem:[%s1 + $0x148] sm:$0xff]
  %v63 = vld [vmem:[%s1 + $0x150] sm:$0xff]
  %v64 = vld [vmem:[%s1 + $0x158] sm:$0xff]
  %v65 = vld [vmem:[%s1 + $0x160] sm:$0xff]
  %v66 = vld [vmem:[%s1 + $0x168] sm:$0xff]
  %v67 = vld [vmem:[%s1 + $0x170] sm:$0xff]
  %v68 = vld [vmem:[%s1 + $0x178] sm:$0xff]
  %v69 = vld [vmem:[%s2] sm:$0xff]
  %v70 = vld [vmem:[%s2 + $0x8] sm:$0xff]
  %v71 = vld [vmem:[%s2 + $0x10] sm:$0xff]
  %v72 = vld [vmem:[%s2 + $0x18] sm:$0xff]
  %v73 = vld [vmem:[%s2 + $0x20] sm:$0xff]
  %v74 = vld [vmem:[%s2 + $0x28] sm:$0xff]
  %v75 = vld [vmem:[%s2 + $0x30] sm:$0xff]
  %v76 = vld [vmem:[%s2 + $0x38] sm:$0xff]
  %v77 = vld [vmem:[%s3] sm:$0xff]
  %v78 = vld [vmem:[%s3 + $0x8] sm:$0xff]
  %v79 = vld [vmem:[%s3 + $0x10] sm:$0xff]
  %v80 = vld [vmem:[%s3 + $0x18] sm:$0xff]
  %v81 = vld [vmem:[%s3 + $0x20] sm:$0xff]
  %v82 = vld [vmem:[%s3 + $0x30] sm:$0xff]
  %84 = vset.pattern.permute.xlu0 32
  %85 = vperm.xlu0 %84, %v70
  %v86 = vpop.permute.xlu0 %85
  %89 = vset.pattern.permute.xlu0 32
  %90 = vperm.xlu0 %89, %v72
  %v91 = vpop.permute.xlu0 %90
  %94 = vset.pattern.permute.xlu0 32
  %95 = vperm.xlu0 %94, %v74
  %v96 = vpop.permute.xlu0 %95
  %99 = vset.pattern.permute.xlu0 32
  %100 = vperm.xlu0 %99, %v76
  %v101 = vpop.permute.xlu0 %100
  %v103 = vmul.f32 %v17, %v86
  %v104 = vmul.f32 %v18, %v91
  %v105 = vmul.f32 %v19, %v96
  %v106 = vmul.f32 %v20, %v101
  %107 = vset.pattern.permute.xlu0 33
  %108 = vperm.xlu0 %107, %v70
  %v109 = vpop.permute.xlu0 %108
  %111 = vset.pattern.permute.xlu0 33
  %112 = vperm.xlu0 %111, %v72
  %v113 = vpop.permute.xlu0 %112
  %115 = vset.pattern.permute.xlu0 33
  %116 = vperm.xlu0 %115, %v74
  %v117 = vpop.permute.xlu0 %116
  %119 = vset.pattern.permute.xlu0 33
  %120 = vperm.xlu0 %119, %v76
  %v121 = vpop.permute.xlu0 %120
  %v123 = vadd.f32 %v103, %v109
  %v124 = vadd.f32 %v104, %v113
  %v125 = vadd.f32 %v105, %v117
  %v126 = vadd.f32 %v106, %v121
  %v127 = vmax.f32 %v123, 0.0
  %v128 = vmax.f32 %v124, 0.0
  %v129 = vmax.f32 %v125, 0.0
  %v130 = vmax.f32 %v126, 0.0
  %vm131 = vcmask 261120
  %v133 = vsel %vm131, %v21, 0
  %v136 = vsel %vm131, %v22, 0
  %v139 = vsel %vm131, %v23, 0
  %v142 = vsel %vm131, %v24, 0
  %v145 = vsel %vm131, %v25, 0
  %v148 = vsel %vm131, %v26, 0
  %v151 = vsel %vm131, %v27, 0
  %v154 = vsel %vm131, %v28, 0
  %v157 = vsel %vm131, %v29, 0
  %v160 = vsel %vm131, %v30, 0
  %v163 = vsel %vm131, %v31, 0
  %v166 = vsel %vm131, %v32, 0
  %168 = vmatprep.subr.mxu0 0.0
  %169 = vmatpush1.msra.mxu0 %v127
  %170 = vmatprep.subr.mxu0 0.0
  %171 = vmatpush1.msra.mxu0 %v128
  %172 = vmatprep.subr.mxu0 0.0
  %173 = vmatpush1.msra.mxu0 %v129
  %174 = vmatprep.subr.mxu0 0.0
  %175 = vmatpush1.msra.mxu0 %v130
  %176 = vmatprep.subr.mxu0 0.0
  %177 = vmatpush1.msra.mxu0 0.0
  %178 = vmatprep.subr.mxu0 0.0
  %179 = vmatpush1.msra.mxu0 0.0
  %180 = vmatprep.subr.mxu0 0.0
  %181 = vmatpush1.msra.mxu0 0.0
  %182 = vmatprep.subr.mxu0 0.0
  %183 = vmatpush1.msra.mxu0 0.0
  %184 = vmatprep.subr.mxu0 0.0
  %185 = vmatpush1.msra.mxu0 0.0
  %186 = vmatprep.subr.mxu0 0.0
  %187 = vmatpush1.msra.mxu0 0.0
  %188 = vmatprep.subr.mxu0 0.0
  %189 = vmatpush1.msra.mxu0 0.0
  %190 = vmatprep.subr.mxu0 0.0
  %191 = vmatpush1.msra.mxu0 0.0
  %192 = vmatprep.subr.mxu0 0.0
  %193 = vmatpush1.msra.mxu0 0.0
  %194 = vmatprep.subr.mxu0 0.0
  %195 = vmatpush1.msra.mxu0 0.0
  %196 = vmatprep.subr.mxu0 0.0
  %197 = vmatpush1.msra.mxu0 0.0
  %198 = vmatprep.subr.mxu0 0.0
  %199 = vmatpush1.msra.mxu0 0.0
  %200 = vmatprep.subr.mxu0 0.0
  %201 = vmatpush1.msra.mxu0 0.0
  %202 = vmatprep.subr.mxu0 0.0
  %203 = vmatpush1.msra.mxu0 0.0
  %204 = vmatprep.subr.mxu0 0.0
  %205 = vmatpush1.msra.mxu0 0.0
  %206 = vmatprep.subr.mxu0 0.0
  %207 = vmatpush1.msra.mxu0 0.0
  %208 = vmatprep.subr.mxu0 0.0
  %209 = vmatpush1.msra.mxu0 0.0
  %210 = vmatprep.subr.mxu0 0.0
  %211 = vmatpush1.msra.mxu0 0.0
  %212 = vmatprep.subr.mxu0 0.0
  %213 = vmatpush1.msra.mxu0 0.0
  %214 = vmatprep.subr.mxu0 0.0
  %215 = vmatpush1.msra.mxu0 0.0
  %216 = vmatprep.subr.mxu0 0.0
  %217 = vmatpush1.msra.mxu0 0.0
  %218 = vmatprep.subr.mxu0 0.0
  %219 = vmatpush1.msra.mxu0 0.0
  %220 = vmatprep.subr.mxu0 0.0
  %221 = vmatpush1.msra.mxu0 0.0
  %222 = vmatprep.subr.mxu0 0.0
  %223 = vmatpush1.msra.mxu0 0.0
  %224 = vmatprep.subr.mxu0 0.0
  %225 = vmatpush1.msra.mxu0 0.0
  %226 = vmatprep.subr.mxu0 0.0
  %227 = vmatpush1.msra.mxu0 0.0
  %228 = vmatprep.subr.mxu0 0.0
  %229 = vmatpush1.msra.mxu0 0.0
  %230 = vmatprep.subr.mxu0 0.0
  %231 = vmatpush1.msra.mxu0 0.0
  %232 = vmatprep.mubr.f32.mxu0 0.0
  %233 = vmatmul.mubr.f32.gmra.mrb[0].mxu0 %v133
  %v234 = vpop.f32.mrb[0].mxu0
  %v235 = vadd.f32 0.0, %v234
  %v236 = vpop.f32.mrb[0].mxu0
  %237 = vmatprep.mubr.f32.mxu0 0.0
  %238 = vmatmul.mubr.f32.gmra.mrb[0].mxu0 %v136
  %v239 = vpop.f32.mrb[0].mxu0
  %v240 = vadd.f32 0.0, %v239
  %v241 = vpop.f32.mrb[0].mxu0
  %242 = vmatprep.mubr.f32.mxu0 0.0
  %243 = vmatmul.mubr.f32.gmra.mrb[0].mxu0 %v139
  %v244 = vpop.f32.mrb[0].mxu0
  %v245 = vadd.f32 0.0, %v244
  %v246 = vpop.f32.mrb[0].mxu0
  %247 = vmatprep.mubr.f32.mxu0 0.0
  %248 = vmatmul.mubr.f32.gmra.mrb[0].mxu0 %v142
  %v249 = vpop.f32.mrb[0].mxu0
  %v250 = vadd.f32 0.0, %v249
  %v251 = vpop.f32.mrb[0].mxu0
  %252 = vmatprep.mubr.f32.mxu0 0.0
  %253 = vmatmul.mubr.f32.gmra.mrb[0].mxu0 %v145
  %v254 = vpop.f32.mrb[0].mxu0
  %v255 = vadd.f32 0.0, %v254
  %v256 = vpop.f32.mrb[0].mxu0
  %257 = vmatprep.mubr.f32.mxu0 0.0
  %258 = vmatmul.mubr.f32.gmra.mrb[0].mxu0 %v148
  %v259 = vpop.f32.mrb[0].mxu0
  %v260 = vadd.f32 0.0, %v259
  %v261 = vpop.f32.mrb[0].mxu0
  %262 = vmatprep.mubr.f32.mxu0 0.0
  %263 = vmatmul.mubr.f32.gmra.mrb[0].mxu0 %v151
  %v264 = vpop.f32.mrb[0].mxu0
  %v265 = vadd.f32 0.0, %v264
  %v266 = vpop.f32.mrb[0].mxu0
  %267 = vmatprep.mubr.f32.mxu0 0.0
  %268 = vmatmul.mubr.f32.gmra.mrb[0].mxu0 %v154
  %v269 = vpop.f32.mrb[0].mxu0
  %v270 = vadd.f32 0.0, %v269
  %v271 = vpop.f32.mrb[0].mxu0
  %272 = vmatprep.mubr.f32.mxu0 0.0
  %273 = vmatmul.mubr.f32.gmra.mrb[0].mxu0 %v157
  %v274 = vpop.f32.mrb[0].mxu0
  %v275 = vadd.f32 0.0, %v274
  %v276 = vpop.f32.mrb[0].mxu0
  %277 = vmatprep.mubr.f32.mxu0 0.0
  %278 = vmatmul.mubr.f32.gmra.mrb[0].mxu0 %v160
  %v279 = vpop.f32.mrb[0].mxu0
  %v280 = vadd.f32 0.0, %v279
  %v281 = vpop.f32.mrb[0].mxu0
  %282 = vmatprep.mubr.f32.mxu0 0.0
  %283 = vmatmul.mubr.f32.gmra.mrb[0].mxu0 %v163
  %v284 = vpop.f32.mrb[0].mxu0
  %v285 = vadd.f32 0.0, %v284
  %v286 = vpop.f32.mrb[0].mxu0
  %287 = vmatprep.mubr.f32.mxu0 0.0
  %288 = vmatmul.mubr.f32.gmra.mrb[0].mxu0 %v166
  %v289 = vpop.f32.mrb[0].mxu0
  %v290 = vadd.f32 0.0, %v289
  %v291 = vpop.f32.mrb[0].mxu0
  %292 = vdwg.mxu0
  %v294 = vsel %vm131, %v235, 0
  %v297 = vsel %vm131, %v240, 0
  %v300 = vsel %vm131, %v245, 0
  %v303 = vsel %vm131, %v250, 0
  %305 = vmatprep.subr.mxu0 0.0
  %306 = vmatpush1.msra.mxu0 %v77
  %307 = vmatprep.subr.mxu0 0.0
  %308 = vmatpush1.msra.mxu0 %v79
  %309 = vmatprep.subr.mxu0 0.0
  %310 = vmatpush1.msra.mxu0 %v81
  %311 = vmatprep.subr.mxu0 0.0
  %312 = vmatpush1.msra.mxu0 %v82
  %313 = vmatprep.subr.mxu0 0.0
  %314 = vmatpush1.msra.mxu0 0.0
  %315 = vmatprep.subr.mxu0 0.0
  %316 = vmatpush1.msra.mxu0 0.0
  %317 = vmatprep.subr.mxu0 0.0
  %318 = vmatpush1.msra.mxu0 0.0
  %319 = vmatprep.subr.mxu0 0.0
  %320 = vmatpush1.msra.mxu0 0.0
  %321 = vmatprep.subr.mxu0 0.0
  %322 = vmatpush1.msra.mxu0 0.0
  %323 = vmatprep.subr.mxu0 0.0
  %324 = vmatpush1.msra.mxu0 0.0
  %325 = vmatprep.subr.mxu0 0.0
  %326 = vmatpush1.msra.mxu0 0.0
  %327 = vmatprep.subr.mxu0 0.0
  %328 = vmatpush1.msra.mxu0 0.0
  %329 = vmatprep.subr.mxu0 0.0
  %330 = vmatpush1.msra.mxu0 0.0
  %331 = vmatprep.subr.mxu0 0.0
  %332 = vmatpush1.msra.mxu0 0.0
  %333 = vmatprep.subr.mxu0 0.0
  %334 = vmatpush1.msra.mxu0 0.0
  %335 = vmatprep.subr.mxu0 0.0
  %336 = vmatpush1.msra.mxu0 0.0
  %337 = vmatprep.subr.mxu0 0.0
  %338 = vmatpush1.msra.mxu0 0.0
  %339 = vmatprep.subr.mxu0 0.0
  %340 = vmatpush1.msra.mxu0 0.0
  %341 = vmatprep.subr.mxu0 0.0
  %342 = vmatpush1.msra.mxu0 0.0
  %343 = vmatprep.subr.mxu0 0.0
  %344 = vmatpush1.msra.mxu0 0.0
  %345 = vmatprep.subr.mxu0 0.0
  %346 = vmatpush1.msra.mxu0 0.0
  %347 = vmatprep.subr.mxu0 0.0
  %348 = vmatpush1.msra.mxu0 0.0
  %349 = vmatprep.subr.mxu0 0.0
  %350 = vmatpush1.msra.mxu0 0.0
  %351 = vmatprep.subr.mxu0 0.0
  %352 = vmatpush1.msra.mxu0 0.0
  %353 = vmatprep.subr.mxu0 0.0
  %354 = vmatpush1.msra.mxu0 0.0
  %355 = vmatprep.subr.mxu0 0.0
  %356 = vmatpush1.msra.mxu0 0.0
  %357 = vmatprep.subr.mxu0 0.0
  %358 = vmatpush1.msra.mxu0 0.0
  %359 = vmatprep.subr.mxu0 0.0
  %360 = vmatpush1.msra.mxu0 0.0
  %361 = vmatprep.subr.mxu0 0.0
  %362 = vmatpush1.msra.mxu0 0.0
  %363 = vmatprep.subr.mxu0 0.0
  %364 = vmatpush1.msra.mxu0 0.0
  %365 = vmatprep.subr.mxu0 0.0
  %366 = vmatpush1.msra.mxu0 0.0
  %367 = vmatprep.subr.mxu0 0.0
  %368 = vmatpush1.msra.mxu0 0.0
  %369 = vmatprep.mubr.f32.mxu0 0.0
  %370 = vmatmul.mubr.f32.gmra.mrb[0].mxu0 %v294
  %v371 = vpop.f32.mrb[0].mxu0
  %v372 = vadd.f32 %v255, %v371
  %v373 = vpop.f32.mrb[0].mxu0
  %374 = vmatprep.mubr.f32.mxu0 0.0
  %375 = vmatmul.mubr.f32.gmra.mrb[0].mxu0 %v297
  %v376 = vpop.f32.mrb[0].mxu0
  %v377 = vadd.f32 %v260, %v376
  %v378 = vpop.f32.mrb[0].mxu0
  %379 = vmatprep.mubr.f32.mxu0 0.0
  %380 = vmatmul.mubr.f32.gmra.mrb[0].mxu0 %v300
  %v381 = vpop.f32.mrb[0].mxu0
  %v382 = vadd.f32 %v265, %v381
  %v383 = vpop.f32.mrb[0].mxu0
  %384 = vmatprep.mubr.f32.mxu0 0.0
  %385 = vmatmul.mubr.f32.gmra.mrb[0].mxu0 %v303
  %v386 = vpop.f32.mrb[0].mxu0
  %v387 = vadd.f32 %v270, %v386
  %v388 = vpop.f32.mrb[0].mxu0
  %389 = vdwg.mxu0
  %394 = vrot.lane.b32.xlu0 %v77, 96
  %v395 = vpop.permute.xlu0 %394
  %396 = vrot.lane.b32.xlu0 %v79, 96
  %v397 = vpop.permute.xlu0 %396
  %398 = vrot.lane.b32.xlu0 %v81, 96
  %v399 = vpop.permute.xlu0 %398
  %400 = vrot.lane.b32.xlu0 %v82, 96
  %v401 = vpop.permute.xlu0 %400
  %v407 = vsel %vm131, %v275, 0
  %v410 = vsel %vm131, %v280, 0
  %v413 = vsel %vm131, %v285, 0
  %v416 = vsel %vm131, %v290, 0
  %418 = vmatprep.subr.mxu0 0.0
  %419 = vmatpush1.msra.mxu0 %v395
  %420 = vmatprep.subr.mxu0 0.0
  %421 = vmatpush1.msra.mxu0 %v397
  %422 = vmatprep.subr.mxu0 0.0
  %423 = vmatpush1.msra.mxu0 %v399
  %424 = vmatprep.subr.mxu0 0.0
  %425 = vmatpush1.msra.mxu0 %v401
  %426 = vmatprep.subr.mxu0 0.0
  %427 = vmatpush1.msra.mxu0 0.0
  %428 = vmatprep.subr.mxu0 0.0
  %429 = vmatpush1.msra.mxu0 0.0
  %430 = vmatprep.subr.mxu0 0.0
  %431 = vmatpush1.msra.mxu0 0.0
  %432 = vmatprep.subr.mxu0 0.0
  %433 = vmatpush1.msra.mxu0 0.0
  %434 = vmatprep.subr.mxu0 0.0
  %435 = vmatpush1.msra.mxu0 0.0
  %436 = vmatprep.subr.mxu0 0.0
  %437 = vmatpush1.msra.mxu0 0.0
  %438 = vmatprep.subr.mxu0 0.0
  %439 = vmatpush1.msra.mxu0 0.0
  %440 = vmatprep.subr.mxu0 0.0
  %441 = vmatpush1.msra.mxu0 0.0
  %442 = vmatprep.subr.mxu0 0.0
  %443 = vmatpush1.msra.mxu0 0.0
  %444 = vmatprep.subr.mxu0 0.0
  %445 = vmatpush1.msra.mxu0 0.0
  %446 = vmatprep.subr.mxu0 0.0
  %447 = vmatpush1.msra.mxu0 0.0
  %448 = vmatprep.subr.mxu0 0.0
  %449 = vmatpush1.msra.mxu0 0.0
  %450 = vmatprep.subr.mxu0 0.0
  %451 = vmatpush1.msra.mxu0 0.0
  %452 = vmatprep.subr.mxu0 0.0
  %453 = vmatpush1.msra.mxu0 0.0
  %454 = vmatprep.subr.mxu0 0.0
  %455 = vmatpush1.msra.mxu0 0.0
  %456 = vmatprep.subr.mxu0 0.0
  %457 = vmatpush1.msra.mxu0 0.0
  %458 = vmatprep.subr.mxu0 0.0
  %459 = vmatpush1.msra.mxu0 0.0
  %460 = vmatprep.subr.mxu0 0.0
  %461 = vmatpush1.msra.mxu0 0.0
  %462 = vmatprep.subr.mxu0 0.0
  %463 = vmatpush1.msra.mxu0 0.0
  %464 = vmatprep.subr.mxu0 0.0
  %465 = vmatpush1.msra.mxu0 0.0
  %466 = vmatprep.subr.mxu0 0.0
  %467 = vmatpush1.msra.mxu0 0.0
  %468 = vmatprep.subr.mxu0 0.0
  %469 = vmatpush1.msra.mxu0 0.0
  %470 = vmatprep.subr.mxu0 0.0
  %471 = vmatpush1.msra.mxu0 0.0
  %472 = vmatprep.subr.mxu0 0.0
  %473 = vmatpush1.msra.mxu0 0.0
  %474 = vmatprep.subr.mxu0 0.0
  %475 = vmatpush1.msra.mxu0 0.0
  %476 = vmatprep.subr.mxu0 0.0
  %477 = vmatpush1.msra.mxu0 0.0
  %478 = vmatprep.subr.mxu0 0.0
  %479 = vmatpush1.msra.mxu0 0.0
  %480 = vmatprep.subr.mxu0 0.0
  %481 = vmatpush1.msra.mxu0 0.0
  %482 = vmatprep.mubr.f32.mxu0 0.0
  %483 = vmatmul.mubr.f32.gmra.mrb[0].mxu0 %v407
  %v484 = vpop.f32.mrb[0].mxu0
  %v485 = vadd.f32 0.0, %v484
  %v486 = vpop.f32.mrb[0].mxu0
  %487 = vmatprep.mubr.f32.mxu0 0.0
  %488 = vmatmul.mubr.f32.gmra.mrb[0].mxu0 %v410
  %v489 = vpop.f32.mrb[0].mxu0
  %v490 = vadd.f32 0.0, %v489
  %v491 = vpop.f32.mrb[0].mxu0
  %492 = vmatprep.mubr.f32.mxu0 0.0
  %493 = vmatmul.mubr.f32.gmra.mrb[0].mxu0 %v413
  %v494 = vpop.f32.mrb[0].mxu0
  %v495 = vadd.f32 0.0, %v494
  %v496 = vpop.f32.mrb[0].mxu0
  %497 = vmatprep.mubr.f32.mxu0 0.0
  %498 = vmatmul.mubr.f32.gmra.mrb[0].mxu0 %v416
  %v499 = vpop.f32.mrb[0].mxu0
  %v500 = vadd.f32 0.0, %v499
  %v501 = vpop.f32.mrb[0].mxu0
  %502 = vdwg.mxu0
  %v503 = vadd.f32 %v372, %v485
  %v504 = vadd.f32 %v377, %v490
  %v505 = vadd.f32 %v382, %v495
  %v506 = vadd.f32 %v387, %v500
  %507 = vset.pattern.permute.xlu0 34
  %508 = vperm.xlu0 %507, %v70
  %v509 = vpop.permute.xlu0 %508
  %511 = vset.pattern.permute.xlu0 34
  %512 = vperm.xlu0 %511, %v72
  %v513 = vpop.permute.xlu0 %512
  %515 = vset.pattern.permute.xlu0 34
  %516 = vperm.xlu0 %515, %v74
  %v517 = vpop.permute.xlu0 %516
  %519 = vset.pattern.permute.xlu0 34
  %520 = vperm.xlu0 %519, %v76
  %v521 = vpop.permute.xlu0 %520
  %v523 = vmul.f32 %v503, %v509
  %v524 = vmul.f32 %v504, %v513
  %v525 = vmul.f32 %v505, %v517
  %v526 = vmul.f32 %v506, %v521
  %527 = vset.pattern.permute.xlu0 35
  %528 = vperm.xlu0 %527, %v70
  %v529 = vpop.permute.xlu0 %528
  %531 = vset.pattern.permute.xlu0 35
  %532 = vperm.xlu0 %531, %v72
  %v533 = vpop.permute.xlu0 %532
  %535 = vset.pattern.permute.xlu0 35
  %536 = vperm.xlu0 %535, %v74
  %v537 = vpop.permute.xlu0 %536
  %539 = vset.pattern.permute.xlu0 35
  %540 = vperm.xlu0 %539, %v76
  %v541 = vpop.permute.xlu0 %540
  %v543 = vadd.f32 %v523, %v529
  %v544 = vadd.f32 %v524, %v533
  %v545 = vadd.f32 %v525, %v537
  %v546 = vadd.f32 %v526, %v541
  %v547 = vmax.f32 %v543, 0.0
  %v548 = vmax.f32 %v544, 0.0
  %v549 = vmax.f32 %v545, 0.0
  %v550 = vmax.f32 %v546, 0.0
  %v552 = vsel %vm131, %v33, 0
  %v555 = vsel %vm131, %v34, 0
  %v558 = vsel %vm131, %v35, 0
  %v561 = vsel %vm131, %v36, 0
  %v564 = vsel %vm131, %v37, 0
  %v567 = vsel %vm131, %v38, 0
  %v570 = vsel %vm131, %v39, 0
  %v573 = vsel %vm131, %v40, 0
  %v576 = vsel %vm131, %v41, 0
  %v579 = vsel %vm131, %v42, 0
  %v582 = vsel %vm131, %v43, 0
  %v585 = vsel %vm131, %v44, 0
  %587 = vmatprep.subr.mxu0 0.0
  %588 = vmatpush1.msra.mxu0 %v547
  %589 = vmatprep.subr.mxu0 0.0
  %590 = vmatpush1.msra.mxu0 %v548
  %591 = vmatprep.subr.mxu0 0.0
  %592 = vmatpush1.msra.mxu0 %v549
  %593 = vmatprep.subr.mxu0 0.0
  %594 = vmatpush1.msra.mxu0 %v550
  %595 = vmatprep.subr.mxu0 0.0
  %596 = vmatpush1.msra.mxu0 0.0
  %597 = vmatprep.subr.mxu0 0.0
  %598 = vmatpush1.msra.mxu0 0.0
  %599 = vmatprep.subr.mxu0 0.0
  %600 = vmatpush1.msra.mxu0 0.0
  %601 = vmatprep.subr.mxu0 0.0
  %602 = vmatpush1.msra.mxu0 0.0
  %603 = vmatprep.subr.mxu0 0.0
  %604 = vmatpush1.msra.mxu0 0.0
  %605 = vmatprep.subr.mxu0 0.0
  %606 = vmatpush1.msra.mxu0 0.0
  %607 = vmatprep.subr.mxu0 0.0
  %608 = vmatpush1.msra.mxu0 0.0
  %609 = vmatprep.subr.mxu0 0.0
  %610 = vmatpush1.msra.mxu0 0.0
  %611 = vmatprep.subr.mxu0 0.0
  %612 = vmatpush1.msra.mxu0 0.0
  %613 = vmatprep.subr.mxu0 0.0
  %614 = vmatpush1.msra.mxu0 0.0
  %615 = vmatprep.subr.mxu0 0.0
  %616 = vmatpush1.msra.mxu0 0.0
  %617 = vmatprep.subr.mxu0 0.0
  %618 = vmatpush1.msra.mxu0 0.0
  %619 = vmatprep.subr.mxu0 0.0
  %620 = vmatpush1.msra.mxu0 0.0
  %621 = vmatprep.subr.mxu0 0.0
  %622 = vmatpush1.msra.mxu0 0.0
  %623 = vmatprep.subr.mxu0 0.0
  %624 = vmatpush1.msra.mxu0 0.0
  %625 = vmatprep.subr.mxu0 0.0
  %626 = vmatpush1.msra.mxu0 0.0
  %627 = vmatprep.subr.mxu0 0.0
  %628 = vmatpush1.msra.mxu0 0.0
  %629 = vmatprep.subr.mxu0 0.0
  %630 = vmatpush1.msra.mxu0 0.0
  %631 = vmatprep.subr.mxu0 0.0
  %632 = vmatpush1.msra.mxu0 0.0
  %633 = vmatprep.subr.mxu0 0.0
  %634 = vmatpush1.msra.mxu0 0.0
  %635 = vmatprep.subr.mxu0 0.0
  %636 = vmatpush1.msra.mxu0 0.0
  %637 = vmatprep.subr.mxu0 0.0
  %638 = vmatpush1.msra.mxu0 0.0
  %639 = vmatprep.subr.mxu0 0.0
  %640 = vmatpush1.msra.mxu0 0.0
  %641 = vmatprep.subr.mxu0 0.0
  %642 = vmatpush1.msra.mxu0 0.0
  %643 = vmatprep.subr.mxu0 0.0
  %644 = vmatpush1.msra.mxu0 0.0
  %645 = vmatprep.subr.mxu0 0.0
  %646 = vmatpush1.msra.mxu0 0.0
  %647 = vmatprep.subr.mxu0 0.0
  %648 = vmatpush1.msra.mxu0 0.0
  %649 = vmatprep.subr.mxu0 0.0
  %650 = vmatpush1.msra.mxu0 0.0
  %651 = vmatprep.mubr.f32.mxu0 0.0
  %652 = vmatmul.mubr.f32.gmra.mrb[0].mxu0 %v552
  %v653 = vpop.f32.mrb[0].mxu0
  %v654 = vadd.f32 0.0, %v653
  %v655 = vpop.f32.mrb[0].mxu0
  %656 = vmatprep.mubr.f32.mxu0 0.0
  %657 = vmatmul.mubr.f32.gmra.mrb[0].mxu0 %v555
  %v658 = vpop.f32.mrb[0].mxu0
  %v659 = vadd.f32 0.0, %v658
  %v660 = vpop.f32.mrb[0].mxu0
  %661 = vmatprep.mubr.f32.mxu0 0.0
  %662 = vmatmul.mubr.f32.gmra.mrb[0].mxu0 %v558
  %v663 = vpop.f32.mrb[0].mxu0
  %v664 = vadd.f32 0.0, %v663
  %v665 = vpop.f32.mrb[0].mxu0
  %666 = vmatprep.mubr.f32.mxu0 0.0
  %667 = vmatmul.mubr.f32.gmra.mrb[0].mxu0 %v561
  %v668 = vpop.f32.mrb[0].mxu0
  %v669 = vadd.f32 0.0, %v668
  %v670 = vpop.f32.mrb[0].mxu0
  %671 = vmatprep.mubr.f32.mxu0 0.0
  %672 = vmatmul.mubr.f32.gmra.mrb[0].mxu0 %v564
  %v673 = vpop.f32.mrb[0].mxu0
  %v674 = vadd.f32 0.0, %v673
  %v675 = vpop.f32.mrb[0].mxu0
  %676 = vmatprep.mubr.f32.mxu0 0.0
  %677 = vmatmul.mubr.f32.gmra.mrb[0].mxu0 %v567
  %v678 = vpop.f32.mrb[0].mxu0
  %v679 = vadd.f32 0.0, %v678
  %v680 = vpop.f32.mrb[0].mxu0
  %681 = vmatprep.mubr.f32.mxu0 0.0
  %682 = vmatmul.mubr.f32.gmra.mrb[0].mxu0 %v570
  %v683 = vpop.f32.mrb[0].mxu0
  %v684 = vadd.f32 0.0, %v683
  %v685 = vpop.f32.mrb[0].mxu0
  %686 = vmatprep.mubr.f32.mxu0 0.0
  %687 = vmatmul.mubr.f32.gmra.mrb[0].mxu0 %v573
  %v688 = vpop.f32.mrb[0].mxu0
  %v689 = vadd.f32 0.0, %v688
  %v690 = vpop.f32.mrb[0].mxu0
  %691 = vmatprep.mubr.f32.mxu0 0.0
  %692 = vmatmul.mubr.f32.gmra.mrb[0].mxu0 %v576
  %v693 = vpop.f32.mrb[0].mxu0
  %v694 = vadd.f32 0.0, %v693
  %v695 = vpop.f32.mrb[0].mxu0
  %696 = vmatprep.mubr.f32.mxu0 0.0
  %697 = vmatmul.mubr.f32.gmra.mrb[0].mxu0 %v579
  %v698 = vpop.f32.mrb[0].mxu0
  %v699 = vadd.f32 0.0, %v698
  %v700 = vpop.f32.mrb[0].mxu0
  %701 = vmatprep.mubr.f32.mxu0 0.0
  %702 = vmatmul.mubr.f32.gmra.mrb[0].mxu0 %v582
  %v703 = vpop.f32.mrb[0].mxu0
  %v704 = vadd.f32 0.0, %v703
  %v705 = vpop.f32.mrb[0].mxu0
  %706 = vmatprep.mubr.f32.mxu0 0.0
  %707 = vmatmul.mubr.f32.gmra.mrb[0].mxu0 %v585
  %v708 = vpop.f32.mrb[0].mxu0
  %v709 = vadd.f32 0.0, %v708
  %v710 = vpop.f32.mrb[0].mxu0
  %711 = vdwg.mxu0
  %v713 = vsel %vm131, %v654, 0
  %v716 = vsel %vm131, %v659, 0
  %v719 = vsel %vm131, %v664, 0
  %v722 = vsel %vm131, %v669, 0
  %724 = vmatprep.subr.mxu0 0.0
  %725 = vmatpush1.msra.mxu0 %v77
  %726 = vmatprep.subr.mxu0 0.0
  %727 = vmatpush1.msra.mxu0 %v79
  %728 = vmatprep.subr.mxu0 0.0
  %729 = vmatpush1.msra.mxu0 %v81
  %730 = vmatprep.subr.mxu0 0.0
  %731 = vmatpush1.msra.mxu0 %v82
  %732 = vmatprep.subr.mxu0 0.0
  %733 = vmatpush1.msra.mxu0 0.0
  %734 = vmatprep.subr.mxu0 0.0
  %735 = vmatpush1.msra.mxu0 0.0
  %736 = vmatprep.subr.mxu0 0.0
  %737 = vmatpush1.msra.mxu0 0.0
  %738 = vmatprep.subr.mxu0 0.0
  %739 = vmatpush1.msra.mxu0 0.0
  %740 = vmatprep.subr.mxu0 0.0
  %741 = vmatpush1.msra.mxu0 0.0
  %742 = vmatprep.subr.mxu0 0.0
  %743 = vmatpush1.msra.mxu0 0.0
  %744 = vmatprep.subr.mxu0 0.0
  %745 = vmatpush1.msra.mxu0 0.0
  %746 = vmatprep.subr.mxu0 0.0
  %747 = vmatpush1.msra.mxu0 0.0
  %748 = vmatprep.subr.mxu0 0.0
  %749 = vmatpush1.msra.mxu0 0.0
  %750 = vmatprep.subr.mxu0 0.0
  %751 = vmatpush1.msra.mxu0 0.0
  %752 = vmatprep.subr.mxu0 0.0
  %753 = vmatpush1.msra.mxu0 0.0
  %754 = vmatprep.subr.mxu0 0.0
  %755 = vmatpush1.msra.mxu0 0.0
  %756 = vmatprep.subr.mxu0 0.0
  %757 = vmatpush1.msra.mxu0 0.0
  %758 = vmatprep.subr.mxu0 0.0
  %759 = vmatpush1.msra.mxu0 0.0
  %760 = vmatprep.subr.mxu0 0.0
  %761 = vmatpush1.msra.mxu0 0.0
  %762 = vmatprep.subr.mxu0 0.0
  %763 = vmatpush1.msra.mxu0 0.0
  %764 = vmatprep.subr.mxu0 0.0
  %765 = vmatpush1.msra.mxu0 0.0
  %766 = vmatprep.subr.mxu0 0.0
  %767 = vmatpush1.msra.mxu0 0.0
  %768 = vmatprep.subr.mxu0 0.0
  %769 = vmatpush1.msra.mxu0 0.0
  %770 = vmatprep.subr.mxu0 0.0
  %771 = vmatpush1.msra.mxu0 0.0
  %772 = vmatprep.subr.mxu0 0.0
  %773 = vmatpush1.msra.mxu0 0.0
  %774 = vmatprep.subr.mxu0 0.0
  %775 = vmatpush1.msra.mxu0 0.0
  %776 = vmatprep.subr.mxu0 0.0
  %777 = vmatpush1.msra.mxu0 0.0
  %778 = vmatprep.subr.mxu0 0.0
  %779 = vmatpush1.msra.mxu0 0.0
  %780 = vmatprep.subr.mxu0 0.0
  %781 = vmatpush1.msra.mxu0 0.0
  %782 = vmatprep.subr.mxu0 0.0
  %783 = vmatpush1.msra.mxu0 0.0
  %784 = vmatprep.subr.mxu0 0.0
  %785 = vmatpush1.msra.mxu0 0.0
  %786 = vmatprep.subr.mxu0 0.0
  %787 = vmatpush1.msra.mxu0 0.0
  %788 = vmatprep.mubr.f32.mxu0 0.0
  %789 = vmatmul.mubr.f32.gmra.mrb[0].mxu0 %v713
  %v790 = vpop.f32.mrb[0].mxu0
  %v791 = vadd.f32 %v674, %v790
  %v792 = vpop.f32.mrb[0].mxu0
  %793 = vmatprep.mubr.f32.mxu0 0.0
  %794 = vmatmul.mubr.f32.gmra.mrb[0].mxu0 %v716
  %v795 = vpop.f32.mrb[0].mxu0
  %v796 = vadd.f32 %v679, %v795
  %v797 = vpop.f32.mrb[0].mxu0
  %798 = vmatprep.mubr.f32.mxu0 0.0
  %799 = vmatmul.mubr.f32.gmra.mrb[0].mxu0 %v719
  %v800 = vpop.f32.mrb[0].mxu0
  %v801 = vadd.f32 %v684, %v800
  %v802 = vpop.f32.mrb[0].mxu0
  %803 = vmatprep.mubr.f32.mxu0 0.0
  %804 = vmatmul.mubr.f32.gmra.mrb[0].mxu0 %v722
  %v805 = vpop.f32.mrb[0].mxu0
  %v806 = vadd.f32 %v689, %v805
  %v807 = vpop.f32.mrb[0].mxu0
  %808 = vdwg.mxu0
  %v810 = vsel %vm131, %v694, 0
  %v813 = vsel %vm131, %v699, 0
  %v816 = vsel %vm131, %v704, 0
  %v819 = vsel %vm131, %v709, 0
  %821 = vmatprep.subr.mxu0 0.0
  %822 = vmatpush1.msra.mxu0 %v395
  %823 = vmatprep.subr.mxu0 0.0
  %824 = vmatpush1.msra.mxu0 %v397
  %825 = vmatprep.subr.mxu0 0.0
  %826 = vmatpush1.msra.mxu0 %v399
  %827 = vmatprep.subr.mxu0 0.0
  %828 = vmatpush1.msra.mxu0 %v401
  %829 = vmatprep.subr.mxu0 0.0
  %830 = vmatpush1.msra.mxu0 0.0
  %831 = vmatprep.subr.mxu0 0.0
  %832 = vmatpush1.msra.mxu0 0.0
  %833 = vmatprep.subr.mxu0 0.0
  %834 = vmatpush1.msra.mxu0 0.0
  %835 = vmatprep.subr.mxu0 0.0
  %836 = vmatpush1.msra.mxu0 0.0
  %837 = vmatprep.subr.mxu0 0.0
  %838 = vmatpush1.msra.mxu0 0.0
  %839 = vmatprep.subr.mxu0 0.0
  %840 = vmatpush1.msra.mxu0 0.0
  %841 = vmatprep.subr.mxu0 0.0
  %842 = vmatpush1.msra.mxu0 0.0
  %843 = vmatprep.subr.mxu0 0.0
  %844 = vmatpush1.msra.mxu0 0.0
  %845 = vmatprep.subr.mxu0 0.0
  %846 = vmatpush1.msra.mxu0 0.0
  %847 = vmatprep.subr.mxu0 0.0
  %848 = vmatpush1.msra.mxu0 0.0
  %849 = vmatprep.subr.mxu0 0.0
  %850 = vmatpush1.msra.mxu0 0.0
  %851 = vmatprep.subr.mxu0 0.0
  %852 = vmatpush1.msra.mxu0 0.0
  %853 = vmatprep.subr.mxu0 0.0
  %854 = vmatpush1.msra.mxu0 0.0
  %855 = vmatprep.subr.mxu0 0.0
  %856 = vmatpush1.msra.mxu0 0.0
  %857 = vmatprep.subr.mxu0 0.0
  %858 = vmatpush1.msra.mxu0 0.0
  %859 = vmatprep.subr.mxu0 0.0
  %860 = vmatpush1.msra.mxu0 0.0
  %861 = vmatprep.subr.mxu0 0.0
  %862 = vmatpush1.msra.mxu0 0.0
  %863 = vmatprep.subr.mxu0 0.0
  %864 = vmatpush1.msra.mxu0 0.0
  %865 = vmatprep.subr.mxu0 0.0
  %866 = vmatpush1.msra.mxu0 0.0
  %867 = vmatprep.subr.mxu0 0.0
  %868 = vmatpush1.msra.mxu0 0.0
  %869 = vmatprep.subr.mxu0 0.0
  %870 = vmatpush1.msra.mxu0 0.0
  %871 = vmatprep.subr.mxu0 0.0
  %872 = vmatpush1.msra.mxu0 0.0
  %873 = vmatprep.subr.mxu0 0.0
  %874 = vmatpush1.msra.mxu0 0.0
  %875 = vmatprep.subr.mxu0 0.0
  %876 = vmatpush1.msra.mxu0 0.0
  %877 = vmatprep.subr.mxu0 0.0
  %878 = vmatpush1.msra.mxu0 0.0
  %879 = vmatprep.subr.mxu0 0.0
  %880 = vmatpush1.msra.mxu0 0.0
  %881 = vmatprep.subr.mxu0 0.0
  %882 = vmatpush1.msra.mxu0 0.0
  %883 = vmatprep.subr.mxu0 0.0
  %884 = vmatpush1.msra.mxu0 0.0
  %885 = vmatprep.mubr.f32.mxu0 0.0
  %886 = vmatmul.mubr.f32.gmra.mrb[0].mxu0 %v810
  %v887 = vpop.f32.mrb[0].mxu0
  %v888 = vadd.f32 0.0, %v887
  %v889 = vpop.f32.mrb[0].mxu0
  %890 = vmatprep.mubr.f32.mxu0 0.0
  %891 = vmatmul.mubr.f32.gmra.mrb[0].mxu0 %v813
  %v892 = vpop.f32.mrb[0].mxu0
  %v893 = vadd.f32 0.0, %v892
  %v894 = vpop.f32.mrb[0].mxu0
  %895 = vmatprep.mubr.f32.mxu0 0.0
  %896 = vmatmul.mubr.f32.gmra.mrb[0].mxu0 %v816
  %v897 = vpop.f32.mrb[0].mxu0
  %v898 = vadd.f32 0.0, %v897
  %v899 = vpop.f32.mrb[0].mxu0
  %900 = vmatprep.mubr.f32.mxu0 0.0
  %901 = vmatmul.mubr.f32.gmra.mrb[0].mxu0 %v819
  %v902 = vpop.f32.mrb[0].mxu0
  %v903 = vadd.f32 0.0, %v902
  %v904 = vpop.f32.mrb[0].mxu0
  %905 = vdwg.mxu0
  %v906 = vadd.f32 %v791, %v888
  %v907 = vadd.f32 %v796, %v893
  %v908 = vadd.f32 %v801, %v898
  %v909 = vadd.f32 %v806, %v903
  %910 = vrot.lane.b32.xlu0 %v77, 64
  %v911 = vpop.permute.xlu0 %910
  %912 = vrot.lane.b32.xlu0 %v79, 64
  %v913 = vpop.permute.xlu0 %912
  %914 = vrot.lane.b32.xlu0 %v81, 64
  %v915 = vpop.permute.xlu0 %914
  %916 = vrot.lane.b32.xlu0 %v82, 64
  %v917 = vpop.permute.xlu0 %916
  %v923 = vsel %vm131, %v906, 0
  %v926 = vsel %vm131, %v907, 0
  %v929 = vsel %vm131, %v908, 0
  %v932 = vsel %vm131, %v909, 0
  %934 = vmatprep.subr.mxu0 0.0
  %935 = vmatpush1.msra.mxu0 %v911
  %936 = vmatprep.subr.mxu0 0.0
  %937 = vmatpush1.msra.mxu0 %v913
  %938 = vmatprep.subr.mxu0 0.0
  %939 = vmatpush1.msra.mxu0 %v915
  %940 = vmatprep.subr.mxu0 0.0
  %941 = vmatpush1.msra.mxu0 %v917
  %942 = vmatprep.subr.mxu0 0.0
  %943 = vmatpush1.msra.mxu0 0.0
  %944 = vmatprep.subr.mxu0 0.0
  %945 = vmatpush1.msra.mxu0 0.0
  %946 = vmatprep.subr.mxu0 0.0
  %947 = vmatpush1.msra.mxu0 0.0
  %948 = vmatprep.subr.mxu0 0.0
  %949 = vmatpush1.msra.mxu0 0.0
  %950 = vmatprep.subr.mxu0 0.0
  %951 = vmatpush1.msra.mxu0 0.0
  %952 = vmatprep.subr.mxu0 0.0
  %953 = vmatpush1.msra.mxu0 0.0
  %954 = vmatprep.subr.mxu0 0.0
  %955 = vmatpush1.msra.mxu0 0.0
  %956 = vmatprep.subr.mxu0 0.0
  %957 = vmatpush1.msra.mxu0 0.0
  %958 = vmatprep.subr.mxu0 0.0
  %959 = vmatpush1.msra.mxu0 0.0
  %960 = vmatprep.subr.mxu0 0.0
  %961 = vmatpush1.msra.mxu0 0.0
  %962 = vmatprep.subr.mxu0 0.0
  %963 = vmatpush1.msra.mxu0 0.0
  %964 = vmatprep.subr.mxu0 0.0
  %965 = vmatpush1.msra.mxu0 0.0
  %966 = vmatprep.subr.mxu0 0.0
  %967 = vmatpush1.msra.mxu0 0.0
  %968 = vmatprep.subr.mxu0 0.0
  %969 = vmatpush1.msra.mxu0 0.0
  %970 = vmatprep.subr.mxu0 0.0
  %971 = vmatpush1.msra.mxu0 0.0
  %972 = vmatprep.subr.mxu0 0.0
  %973 = vmatpush1.msra.mxu0 0.0
  %974 = vmatprep.subr.mxu0 0.0
  %975 = vmatpush1.msra.mxu0 0.0
  %976 = vmatprep.subr.mxu0 0.0
  %977 = vmatpush1.msra.mxu0 0.0
  %978 = vmatprep.subr.mxu0 0.0
  %979 = vmatpush1.msra.mxu0 0.0
  %980 = vmatprep.subr.mxu0 0.0
  %981 = vmatpush1.msra.mxu0 0.0
  %982 = vmatprep.subr.mxu0 0.0
  %983 = vmatpush1.msra.mxu0 0.0
  %984 = vmatprep.subr.mxu0 0.0
  %985 = vmatpush1.msra.mxu0 0.0
  %986 = vmatprep.subr.mxu0 0.0
  %987 = vmatpush1.msra.mxu0 0.0
  %988 = vmatprep.subr.mxu0 0.0
  %989 = vmatpush1.msra.mxu0 0.0
  %990 = vmatprep.subr.mxu0 0.0
  %991 = vmatpush1.msra.mxu0 0.0
  %992 = vmatprep.subr.mxu0 0.0
  %993 = vmatpush1.msra.mxu0 0.0
  %994 = vmatprep.subr.mxu0 0.0
  %995 = vmatpush1.msra.mxu0 0.0
  %996 = vmatprep.subr.mxu0 0.0
  %997 = vmatpush1.msra.mxu0 0.0
  %998 = vmatprep.mubr.f32.mxu0 0.0
  %999 = vmatmul.mubr.f32.gmra.mrb[0].mxu0 %v923
  %v1000 = vpop.f32.mrb[0].mxu0
  %v1001 = vadd.f32 0.0, %v1000
  %v1002 = vpop.f32.mrb[0].mxu0
  %1003 = vmatprep.mubr.f32.mxu0 0.0
  %1004 = vmatmul.mubr.f32.gmra.mrb[0].mxu0 %v926
  %v1005 = vpop.f32.mrb[0].mxu0
  %v1006 = vadd.f32 0.0, %v1005
  %v1007 = vpop.f32.mrb[0].mxu0
  %1008 = vmatprep.mubr.f32.mxu0 0.0
  %1009 = vmatmul.mubr.f32.gmra.mrb[0].mxu0 %v929
  %v1010 = vpop.f32.mrb[0].mxu0
  %v1011 = vadd.f32 0.0, %v1010
  %v1012 = vpop.f32.mrb[0].mxu0
  %1013 = vmatprep.mubr.f32.mxu0 0.0
  %1014 = vmatmul.mubr.f32.gmra.mrb[0].mxu0 %v932
  %v1015 = vpop.f32.mrb[0].mxu0
  %v1016 = vadd.f32 0.0, %v1015
  %v1017 = vpop.f32.mrb[0].mxu0
  %1018 = vdwg.mxu0
  %1019 = vset.pattern.permute.xlu0 36
  %1020 = vperm.xlu0 %1019, %v70
  %v1021 = vpop.permute.xlu0 %1020
  %1023 = vset.pattern.permute.xlu0 36
  %1024 = vperm.xlu0 %1023, %v72
  %v1025 = vpop.permute.xlu0 %1024
  %1027 = vset.pattern.permute.xlu0 36
  %1028 = vperm.xlu0 %1027, %v74
  %v1029 = vpop.permute.xlu0 %1028
  %1031 = vset.pattern.permute.xlu0 36
  %1032 = vperm.xlu0 %1031, %v76
  %v1033 = vpop.permute.xlu0 %1032
  %v1036 = vsel %vm131, %v69, 0
  %v1039 = vsel %vm131, %v71, 0
  %v1042 = vsel %vm131, %v73, 0
  %v1045 = vsel %vm131, %v75, 0
  %1047 = vmatprep.subr.mxu0 0.0
  %1048 = vmatpush1.msra.mxu0 %v1001
  %1049 = vmatprep.subr.mxu0 0.0
  %1050 = vmatpush1.msra.mxu0 %v1006
  %1051 = vmatprep.subr.mxu0 0.0
  %1052 = vmatpush1.msra.mxu0 %v1011
  %1053 = vmatprep.subr.mxu0 0.0
  %1054 = vmatpush1.msra.mxu0 %v1016
  %1055 = vmatprep.subr.mxu0 0.0
  %1056 = vmatpush1.msra.mxu0 0.0
  %1057 = vmatprep.subr.mxu0 0.0
  %1058 = vmatpush1.msra.mxu0 0.0
  %1059 = vmatprep.subr.mxu0 0.0
  %1060 = vmatpush1.msra.mxu0 0.0
  %1061 = vmatprep.subr.mxu0 0.0
  %1062 = vmatpush1.msra.mxu0 0.0
  %1063 = vmatprep.subr.mxu0 0.0
  %1064 = vmatpush1.msra.mxu0 0.0
  %1065 = vmatprep.subr.mxu0 0.0
  %1066 = vmatpush1.msra.mxu0 0.0
  %1067 = vmatprep.subr.mxu0 0.0
  %1068 = vmatpush1.msra.mxu0 0.0
  %1069 = vmatprep.subr.mxu0 0.0
  %1070 = vmatpush1.msra.mxu0 0.0
  %1071 = vmatprep.subr.mxu0 0.0
  %1072 = vmatpush1.msra.mxu0 0.0
  %1073 = vmatprep.subr.mxu0 0.0
  %1074 = vmatpush1.msra.mxu0 0.0
  %1075 = vmatprep.subr.mxu0 0.0
  %1076 = vmatpush1.msra.mxu0 0.0
  %1077 = vmatprep.subr.mxu0 0.0
  %1078 = vmatpush1.msra.mxu0 0.0
  %1079 = vmatprep.subr.mxu0 0.0
  %1080 = vmatpush1.msra.mxu0 0.0
  %1081 = vmatprep.subr.mxu0 0.0
  %1082 = vmatpush1.msra.mxu0 0.0
  %1083 = vmatprep.subr.mxu0 0.0
  %1084 = vmatpush1.msra.mxu0 0.0
  %1085 = vmatprep.subr.mxu0 0.0
  %1086 = vmatpush1.msra.mxu0 0.0
  %1087 = vmatprep.subr.mxu0 0.0
  %1088 = vmatpush1.msra.mxu0 0.0
  %1089 = vmatprep.subr.mxu0 0.0
  %1090 = vmatpush1.msra.mxu0 0.0
  %1091 = vmatprep.subr.mxu0 0.0
  %1092 = vmatpush1.msra.mxu0 0.0
  %1093 = vmatprep.subr.mxu0 0.0
  %1094 = vmatpush1.msra.mxu0 0.0
  %1095 = vmatprep.subr.mxu0 0.0
  %1096 = vmatpush1.msra.mxu0 0.0
  %1097 = vmatprep.subr.mxu0 0.0
  %1098 = vmatpush1.msra.mxu0 0.0
  %1099 = vmatprep.subr.mxu0 0.0
  %1100 = vmatpush1.msra.mxu0 0.0
  %1101 = vmatprep.subr.mxu0 0.0
  %1102 = vmatpush1.msra.mxu0 0.0
  %1103 = vmatprep.subr.mxu0 0.0
  %1104 = vmatpush1.msra.mxu0 0.0
  %1105 = vmatprep.subr.mxu0 0.0
  %1106 = vmatpush1.msra.mxu0 0.0
  %1107 = vmatprep.subr.mxu0 0.0
  %1108 = vmatpush1.msra.mxu0 0.0
  %1109 = vmatprep.subr.mxu0 0.0
  %1110 = vmatpush1.msra.mxu0 0.0
  %1111 = vmatprep.mubr.f32.mxu0 0.0
  %1112 = vmatmul.mubr.f32.gmra.mrb[0].mxu0 %v1036
  %v1113 = vpop.f32.mrb[0].mxu0
  %v1114 = vadd.f32 %v1021, %v1113
  %v1115 = vpop.f32.mrb[0].mxu0
  %1116 = vmatprep.mubr.f32.mxu0 0.0
  %1117 = vmatmul.mubr.f32.gmra.mrb[0].mxu0 %v1039
  %v1118 = vpop.f32.mrb[0].mxu0
  %v1119 = vadd.f32 %v1025, %v1118
  %v1120 = vpop.f32.mrb[0].mxu0
  %1121 = vmatprep.mubr.f32.mxu0 0.0
  %1122 = vmatmul.mubr.f32.gmra.mrb[0].mxu0 %v1042
  %v1123 = vpop.f32.mrb[0].mxu0
  %v1124 = vadd.f32 %v1029, %v1123
  %v1125 = vpop.f32.mrb[0].mxu0
  %1126 = vmatprep.mubr.f32.mxu0 0.0
  %1127 = vmatmul.mubr.f32.gmra.mrb[0].mxu0 %v1045
  %v1128 = vpop.f32.mrb[0].mxu0
  %v1129 = vadd.f32 %v1033, %v1128
  %v1130 = vpop.f32.mrb[0].mxu0
  %1131 = vdwg.mxu0
  %v1132 = vmax.f32 %v1114, 0.0
  %v1133 = vmax.f32 %v1119, 0.0
  %v1134 = vmax.f32 %v1124, 0.0
  %v1135 = vmax.f32 %v1129, 0.0
  %1136 = vset.pattern.permute.xlu0 37
  %1137 = vperm.xlu0 %1136, %v70
  %v1138 = vpop.permute.xlu0 %1137
  %1140 = vset.pattern.permute.xlu0 37
  %1141 = vperm.xlu0 %1140, %v72
  %v1142 = vpop.permute.xlu0 %1141
  %1144 = vset.pattern.permute.xlu0 37
  %1145 = vperm.xlu0 %1144, %v74
  %v1146 = vpop.permute.xlu0 %1145
  %1148 = vset.pattern.permute.xlu0 37
  %1149 = vperm.xlu0 %1148, %v76
  %v1150 = vpop.permute.xlu0 %1149
  %1152 = vrot.lane.b32.xlu0 %v69, 96
  %v1153 = vpop.permute.xlu0 %1152
  %1154 = vrot.lane.b32.xlu0 %v71, 96
  %v1155 = vpop.permute.xlu0 %1154
  %1156 = vrot.lane.b32.xlu0 %v73, 96
  %v1157 = vpop.permute.xlu0 %1156
  %1158 = vrot.lane.b32.xlu0 %v75, 96
  %v1159 = vpop.permute.xlu0 %1158
  %v1160 = vsel %vm131, %v1153, 0
  %v1162 = vsel %vm131, %v1155, 0
  %v1164 = vsel %vm131, %v1157, 0
  %v1166 = vsel %vm131, %v1159, 0
  %1168 = vmatprep.subr.mxu0 0.0
  %1169 = vmatpush1.msra.mxu0 %v1132
  %1170 = vmatprep.subr.mxu0 0.0
  %1171 = vmatpush1.msra.mxu0 %v1133
  %1172 = vmatprep.subr.mxu0 0.0
  %1173 = vmatpush1.msra.mxu0 %v1134
  %1174 = vmatprep.subr.mxu0 0.0
  %1175 = vmatpush1.msra.mxu0 %v1135
  %1176 = vmatprep.subr.mxu0 0.0
  %1177 = vmatpush1.msra.mxu0 0.0
  %1178 = vmatprep.subr.mxu0 0.0
  %1179 = vmatpush1.msra.mxu0 0.0
  %1180 = vmatprep.subr.mxu0 0.0
  %1181 = vmatpush1.msra.mxu0 0.0
  %1182 = vmatprep.subr.mxu0 0.0
  %1183 = vmatpush1.msra.mxu0 0.0
  %1184 = vmatprep.subr.mxu0 0.0
  %1185 = vmatpush1.msra.mxu0 0.0
  %1186 = vmatprep.subr.mxu0 0.0
  %1187 = vmatpush1.msra.mxu0 0.0
  %1188 = vmatprep.subr.mxu0 0.0
  %1189 = vmatpush1.msra.mxu0 0.0
  %1190 = vmatprep.subr.mxu0 0.0
  %1191 = vmatpush1.msra.mxu0 0.0
  %1192 = vmatprep.subr.mxu0 0.0
  %1193 = vmatpush1.msra.mxu0 0.0
  %1194 = vmatprep.subr.mxu0 0.0
  %1195 = vmatpush1.msra.mxu0 0.0
  %1196 = vmatprep.subr.mxu0 0.0
  %1197 = vmatpush1.msra.mxu0 0.0
  %1198 = vmatprep.subr.mxu0 0.0
  %1199 = vmatpush1.msra.mxu0 0.0
  %1200 = vmatprep.subr.mxu0 0.0
  %1201 = vmatpush1.msra.mxu0 0.0
  %1202 = vmatprep.subr.mxu0 0.0
  %1203 = vmatpush1.msra.mxu0 0.0
  %1204 = vmatprep.subr.mxu0 0.0
  %1205 = vmatpush1.msra.mxu0 0.0
  %1206 = vmatprep.subr.mxu0 0.0
  %1207 = vmatpush1.msra.mxu0 0.0
  %1208 = vmatprep.subr.mxu0 0.0
  %1209 = vmatpush1.msra.mxu0 0.0
  %1210 = vmatprep.subr.mxu0 0.0
  %1211 = vmatpush1.msra.mxu0 0.0
  %1212 = vmatprep.subr.mxu0 0.0
  %1213 = vmatpush1.msra.mxu0 0.0
  %1214 = vmatprep.subr.mxu0 0.0
  %1215 = vmatpush1.msra.mxu0 0.0
  %1216 = vmatprep.subr.mxu0 0.0
  %1217 = vmatpush1.msra.mxu0 0.0
  %1218 = vmatprep.subr.mxu0 0.0
  %1219 = vmatpush1.msra.mxu0 0.0
  %1220 = vmatprep.subr.mxu0 0.0
  %1221 = vmatpush1.msra.mxu0 0.0
  %1222 = vmatprep.subr.mxu0 0.0
  %1223 = vmatpush1.msra.mxu0 0.0
  %1224 = vmatprep.subr.mxu0 0.0
  %1225 = vmatpush1.msra.mxu0 0.0
  %1226 = vmatprep.subr.mxu0 0.0
  %1227 = vmatpush1.msra.mxu0 0.0
  %1228 = vmatprep.subr.mxu0 0.0
  %1229 = vmatpush1.msra.mxu0 0.0
  %1230 = vmatprep.subr.mxu0 0.0
  %1231 = vmatpush1.msra.mxu0 0.0
  %1232 = vmatprep.mubr.f32.mxu0 0.0
  %1233 = vmatmul.mubr.f32.gmra.mrb[0].mxu0 %v1160
  %v1234 = vpop.f32.mrb[0].mxu0
  %v1235 = vadd.f32 %v1138, %v1234
  %v1236 = vpop.f32.mrb[0].mxu0
  %1237 = vmatprep.mubr.f32.mxu0 0.0
  %1238 = vmatmul.mubr.f32.gmra.mrb[0].mxu0 %v1162
  %v1239 = vpop.f32.mrb[0].mxu0
  %v1240 = vadd.f32 %v1142, %v1239
  %v1241 = vpop.f32.mrb[0].mxu0
  %1242 = vmatprep.mubr.f32.mxu0 0.0
  %1243 = vmatmul.mubr.f32.gmra.mrb[0].mxu0 %v1164
  %v1244 = vpop.f32.mrb[0].mxu0
  %v1245 = vadd.f32 %v1146, %v1244
  %v1246 = vpop.f32.mrb[0].mxu0
  %1247 = vmatprep.mubr.f32.mxu0 0.0
  %1248 = vmatmul.mubr.f32.gmra.mrb[0].mxu0 %v1166
  %v1249 = vpop.f32.mrb[0].mxu0
  %v1250 = vadd.f32 %v1150, %v1249
  %v1251 = vpop.f32.mrb[0].mxu0
  %1252 = vdwg.mxu0
  %v1253 = vxor.u32 %v1235, 2147483648
  %v1254 = vxor.u32 %v1240, 2147483648
  %v1255 = vxor.u32 %v1245, 2147483648
  %v1256 = vxor.u32 %v1250, 2147483648
  %v1257 = vmul.f32 %v1253, 1.442695
  %v1258 = vpow.pop %v1257
  %v1259 = vmul.f32 %v1254, 1.442695
  %v1260 = vpow.pop %v1259
  %v1261 = vmul.f32 %v1255, 1.442695
  %v1262 = vpow.pop %v1261
  %v1263 = vmul.f32 %v1256, 1.442695
  %v1264 = vpow.pop %v1263
  %v1265 = vadd.f32 %v1258, 1.0
  %v1266 = vadd.f32 %v1260, 1.0
  %v1267 = vadd.f32 %v1262, 1.0
  %v1268 = vadd.f32 %v1264, 1.0
  %v1269 = vrcp.pop %v1265
  %v1270 = vmul.f32 1.0, %v1269
  %v1271 = vrcp.pop %v1266
  %v1272 = vmul.f32 1.0, %v1271
  %v1273 = vrcp.pop %v1267
  %v1274 = vmul.f32 1.0, %v1273
  %v1275 = vrcp.pop %v1268
  %v1276 = vmul.f32 1.0, %v1275
  %v1277 = vmul.f32 %v906, %v1270
  %v1278 = vmul.f32 %v907, %v1272
  %v1279 = vmul.f32 %v908, %v1274
  %v1280 = vmul.f32 %v909, %v1276
  %v1281 = vadd.f32 %v1277, %v17
  %v1282 = vadd.f32 %v1278, %v18
  %v1283 = vadd.f32 %v1279, %v19
  %v1284 = vadd.f32 %v1280, %v20
  %1285 = vrot.lane.b32.xlu0 %v77, 32
  %v1286 = vpop.permute.xlu0 %1285
  %1287 = vrot.lane.b32.xlu0 %v79, 32
  %v1288 = vpop.permute.xlu0 %1287
  %1289 = vrot.lane.b32.xlu0 %v81, 32
  %v1290 = vpop.permute.xlu0 %1289
  %1291 = vrot.lane.b32.xlu0 %v82, 32
  %v1292 = vpop.permute.xlu0 %1291
  %v1298 = vsel %vm131, %v1281, 0
  %v1301 = vsel %vm131, %v1282, 0
  %v1304 = vsel %vm131, %v1283, 0
  %v1307 = vsel %vm131, %v1284, 0
  %1309 = vmatprep.subr.mxu0 0.0
  %1310 = vmatpush1.msra.mxu0 %v1286
  %1311 = vmatprep.subr.mxu0 0.0
  %1312 = vmatpush1.msra.mxu0 %v1288
  %1313 = vmatprep.subr.mxu0 0.0
  %1314 = vmatpush1.msra.mxu0 %v1290
  %1315 = vmatprep.subr.mxu0 0.0
  %1316 = vmatpush1.msra.mxu0 %v1292
  %1317 = vmatprep.subr.mxu0 0.0
  %1318 = vmatpush1.msra.mxu0 0.0
  %1319 = vmatprep.subr.mxu0 0.0
  %1320 = vmatpush1.msra.mxu0 0.0
  %1321 = vmatprep.subr.mxu0 0.0
  %1322 = vmatpush1.msra.mxu0 0.0
  %1323 = vmatprep.subr.mxu0 0.0
  %1324 = vmatpush1.msra.mxu0 0.0
  %1325 = vmatprep.subr.mxu0 0.0
  %1326 = vmatpush1.msra.mxu0 0.0
  %1327 = vmatprep.subr.mxu0 0.0
  %1328 = vmatpush1.msra.mxu0 0.0
  %1329 = vmatprep.subr.mxu0 0.0
  %1330 = vmatpush1.msra.mxu0 0.0
  %1331 = vmatprep.subr.mxu0 0.0
  %1332 = vmatpush1.msra.mxu0 0.0
  %1333 = vmatprep.subr.mxu0 0.0
  %1334 = vmatpush1.msra.mxu0 0.0
  %1335 = vmatprep.subr.mxu0 0.0
  %1336 = vmatpush1.msra.mxu0 0.0
  %1337 = vmatprep.subr.mxu0 0.0
  %1338 = vmatpush1.msra.mxu0 0.0
  %1339 = vmatprep.subr.mxu0 0.0
  %1340 = vmatpush1.msra.mxu0 0.0
  %1341 = vmatprep.subr.mxu0 0.0
  %1342 = vmatpush1.msra.mxu0 0.0
  %1343 = vmatprep.subr.mxu0 0.0
  %1344 = vmatpush1.msra.mxu0 0.0
  %1345 = vmatprep.subr.mxu0 0.0
  %1346 = vmatpush1.msra.mxu0 0.0
  %1347 = vmatprep.subr.mxu0 0.0
  %1348 = vmatpush1.msra.mxu0 0.0
  %1349 = vmatprep.subr.mxu0 0.0
  %1350 = vmatpush1.msra.mxu0 0.0
  %1351 = vmatprep.subr.mxu0 0.0
  %1352 = vmatpush1.msra.mxu0 0.0
  %1353 = vmatprep.subr.mxu0 0.0
  %1354 = vmatpush1.msra.mxu0 0.0
  %1355 = vmatprep.subr.mxu0 0.0
  %1356 = vmatpush1.msra.mxu0 0.0
  %1357 = vmatprep.subr.mxu0 0.0
  %1358 = vmatpush1.msra.mxu0 0.0
  %1359 = vmatprep.subr.mxu0 0.0
  %1360 = vmatpush1.msra.mxu0 0.0
  %1361 = vmatprep.subr.mxu0 0.0
  %1362 = vmatpush1.msra.mxu0 0.0
  %1363 = vmatprep.subr.mxu0 0.0
  %1364 = vmatpush1.msra.mxu0 0.0
  %1365 = vmatprep.subr.mxu0 0.0
  %1366 = vmatpush1.msra.mxu0 0.0
  %1367 = vmatprep.subr.mxu0 0.0
  %1368 = vmatpush1.msra.mxu0 0.0
  %1369 = vmatprep.subr.mxu0 0.0
  %1370 = vmatpush1.msra.mxu0 0.0
  %1371 = vmatprep.subr.mxu0 0.0
  %1372 = vmatpush1.msra.mxu0 0.0
  %1373 = vmatprep.mubr.f32.mxu0 0.0
  %1374 = vmatmul.mubr.f32.gmra.mrb[0].mxu0 %v1298
  %v1375 = vpop.f32.mrb[0].mxu0
  %v1376 = vadd.f32 0.0, %v1375
  %v1377 = vpop.f32.mrb[0].mxu0
  %1378 = vmatprep.mubr.f32.mxu0 0.0
  %1379 = vmatmul.mubr.f32.gmra.mrb[0].mxu0 %v1301
  %v1380 = vpop.f32.mrb[0].mxu0
  %v1381 = vadd.f32 0.0, %v1380
  %v1382 = vpop.f32.mrb[0].mxu0
  %1383 = vmatprep.mubr.f32.mxu0 0.0
  %1384 = vmatmul.mubr.f32.gmra.mrb[0].mxu0 %v1304
  %v1385 = vpop.f32.mrb[0].mxu0
  %v1386 = vadd.f32 0.0, %v1385
  %v1387 = vpop.f32.mrb[0].mxu0
  %1388 = vmatprep.mubr.f32.mxu0 0.0
  %1389 = vmatmul.mubr.f32.gmra.mrb[0].mxu0 %v1307
  %v1390 = vpop.f32.mrb[0].mxu0
  %v1391 = vadd.f32 0.0, %v1390
  %v1392 = vpop.f32.mrb[0].mxu0
  %1393 = vdwg.mxu0
  %1394 = vset.pattern.permute.xlu0 44
  %1395 = vperm.xlu0 %1394, %v70
  %v1396 = vpop.permute.xlu0 %1395
  %1398 = vset.pattern.permute.xlu0 44
  %1399 = vperm.xlu0 %1398, %v72
  %v1400 = vpop.permute.xlu0 %1399
  %1402 = vset.pattern.permute.xlu0 44
  %1403 = vperm.xlu0 %1402, %v74
  %v1404 = vpop.permute.xlu0 %1403
  %1406 = vset.pattern.permute.xlu0 44
  %1407 = vperm.xlu0 %1406, %v76
  %v1408 = vpop.permute.xlu0 %1407
  %v1410 = vsel %vm131, %v70, 0
  %v1412 = vsel %vm131, %v72, 0
  %v1414 = vsel %vm131, %v74, 0
  %v1416 = vsel %vm131, %v76, 0
  %1418 = vmatprep.subr.mxu0 0.0
  %1419 = vmatpush1.msra.mxu0 %v1376
  %1420 = vmatprep.subr.mxu0 0.0
  %1421 = vmatpush1.msra.mxu0 %v1381
  %1422 = vmatprep.subr.mxu0 0.0
  %1423 = vmatpush1.msra.mxu0 %v1386
  %1424 = vmatprep.subr.mxu0 0.0
  %1425 = vmatpush1.msra.mxu0 %v1391
  %1426 = vmatprep.subr.mxu0 0.0
  %1427 = vmatpush1.msra.mxu0 0.0
  %1428 = vmatprep.subr.mxu0 0.0
  %1429 = vmatpush1.msra.mxu0 0.0
  %1430 = vmatprep.subr.mxu0 0.0
  %1431 = vmatpush1.msra.mxu0 0.0
  %1432 = vmatprep.subr.mxu0 0.0
  %1433 = vmatpush1.msra.mxu0 0.0
  %1434 = vmatprep.subr.mxu0 0.0
  %1435 = vmatpush1.msra.mxu0 0.0
  %1436 = vmatprep.subr.mxu0 0.0
  %1437 = vmatpush1.msra.mxu0 0.0
  %1438 = vmatprep.subr.mxu0 0.0
  %1439 = vmatpush1.msra.mxu0 0.0
  %1440 = vmatprep.subr.mxu0 0.0
  %1441 = vmatpush1.msra.mxu0 0.0
  %1442 = vmatprep.subr.mxu0 0.0
  %1443 = vmatpush1.msra.mxu0 0.0
  %1444 = vmatprep.subr.mxu0 0.0
  %1445 = vmatpush1.msra.mxu0 0.0
  %1446 = vmatprep.subr.mxu0 0.0
  %1447 = vmatpush1.msra.mxu0 0.0
  %1448 = vmatprep.subr.mxu0 0.0
  %1449 = vmatpush1.msra.mxu0 0.0
  %1450 = vmatprep.subr.mxu0 0.0
  %1451 = vmatpush1.msra.mxu0 0.0
  %1452 = vmatprep.subr.mxu0 0.0
  %1453 = vmatpush1.msra.mxu0 0.0
  %1454 = vmatprep.subr.mxu0 0.0
  %1455 = vmatpush1.msra.mxu0 0.0
  %1456 = vmatprep.subr.mxu0 0.0
  %1457 = vmatpush1.msra.mxu0 0.0
  %1458 = vmatprep.subr.mxu0 0.0
  %1459 = vmatpush1.msra.mxu0 0.0
  %1460 = vmatprep.subr.mxu0 0.0
  %1461 = vmatpush1.msra.mxu0 0.0
  %1462 = vmatprep.subr.mxu0 0.0
  %1463 = vmatpush1.msra.mxu0 0.0
  %1464 = vmatprep.subr.mxu0 0.0
  %1465 = vmatpush1.msra.mxu0 0.0
  %1466 = vmatprep.subr.mxu0 0.0
  %1467 = vmatpush1.msra.mxu0 0.0
  %1468 = vmatprep.subr.mxu0 0.0
  %1469 = vmatpush1.msra.mxu0 0.0
  %1470 = vmatprep.subr.mxu0 0.0
  %1471 = vmatpush1.msra.mxu0 0.0
  %1472 = vmatprep.subr.mxu0 0.0
  %1473 = vmatpush1.msra.mxu0 0.0
  %1474 = vmatprep.subr.mxu0 0.0
  %1475 = vmatpush1.msra.mxu0 0.0
  %1476 = vmatprep.subr.mxu0 0.0
  %1477 = vmatpush1.msra.mxu0 0.0
  %1478 = vmatprep.subr.mxu0 0.0
  %1479 = vmatpush1.msra.mxu0 0.0
  %1480 = vmatprep.subr.mxu0 0.0
  %1481 = vmatpush1.msra.mxu0 0.0
  %1482 = vmatprep.mubr.f32.mxu0 0.0
  %1483 = vmatmul.mubr.f32.gmra.mrb[0].mxu0 %v1410
  %v1484 = vpop.f32.mrb[0].mxu0
  %v1485 = vadd.f32 %v1396, %v1484
  %v1486 = vpop.f32.mrb[0].mxu0
  %1487 = vmatprep.mubr.f32.mxu0 0.0
  %1488 = vmatmul.mubr.f32.gmra.mrb[0].mxu0 %v1412
  %v1489 = vpop.f32.mrb[0].mxu0
  %v1490 = vadd.f32 %v1400, %v1489
  %v1491 = vpop.f32.mrb[0].mxu0
  %1492 = vmatprep.mubr.f32.mxu0 0.0
  %1493 = vmatmul.mubr.f32.gmra.mrb[0].mxu0 %v1414
  %v1494 = vpop.f32.mrb[0].mxu0
  %v1495 = vadd.f32 %v1404, %v1494
  %v1496 = vpop.f32.mrb[0].mxu0
  %1497 = vmatprep.mubr.f32.mxu0 0.0
  %1498 = vmatmul.mubr.f32.gmra.mrb[0].mxu0 %v1416
  %v1499 = vpop.f32.mrb[0].mxu0
  %v1500 = vadd.f32 %v1408, %v1499
  %v1501 = vpop.f32.mrb[0].mxu0
  %1502 = vdwg.mxu0
  %1503 = vset.pattern.permute.xlu0 38
  %1504 = vperm.xlu0 %1503, %v70
  %v1505 = vpop.permute.xlu0 %1504
  %1507 = vset.pattern.permute.xlu0 38
  %1508 = vperm.xlu0 %1507, %v72
  %v1509 = vpop.permute.xlu0 %1508
  %1511 = vset.pattern.permute.xlu0 38
  %1512 = vperm.xlu0 %1511, %v74
  %v1513 = vpop.permute.xlu0 %1512
  %1515 = vset.pattern.permute.xlu0 38
  %1516 = vperm.xlu0 %1515, %v76
  %v1517 = vpop.permute.xlu0 %1516
  %v1519 = vmul.f32 %v1281, %v1505
  %v1520 = vmul.f32 %v1282, %v1509
  %v1521 = vmul.f32 %v1283, %v1513
  %v1522 = vmul.f32 %v1284, %v1517
  %1523 = vset.pattern.permute.xlu0 39
  %1524 = vperm.xlu0 %1523, %v70
  %v1525 = vpop.permute.xlu0 %1524
  %1527 = vset.pattern.permute.xlu0 39
  %1528 = vperm.xlu0 %1527, %v72
  %v1529 = vpop.permute.xlu0 %1528
  %1531 = vset.pattern.permute.xlu0 39
  %1532 = vperm.xlu0 %1531, %v74
  %v1533 = vpop.permute.xlu0 %1532
  %1535 = vset.pattern.permute.xlu0 39
  %1536 = vperm.xlu0 %1535, %v76
  %v1537 = vpop.permute.xlu0 %1536
  %v1539 = vadd.f32 %v1519, %v1525
  %v1540 = vadd.f32 %v1520, %v1529
  %v1541 = vadd.f32 %v1521, %v1533
  %v1542 = vadd.f32 %v1522, %v1537
  %v1543 = vmax.f32 %v1539, 0.0
  %v1544 = vmax.f32 %v1540, 0.0
  %v1545 = vmax.f32 %v1541, 0.0
  %v1546 = vmax.f32 %v1542, 0.0
  %v1548 = vsel %vm131, %v45, 0
  %v1551 = vsel %vm131, %v46, 0
  %v1554 = vsel %vm131, %v47, 0
  %v1557 = vsel %vm131, %v48, 0
  %v1560 = vsel %vm131, %v49, 0
  %v1563 = vsel %vm131, %v50, 0
  %v1566 = vsel %vm131, %v51, 0
  %v1569 = vsel %vm131, %v52, 0
  %v1572 = vsel %vm131, %v53, 0
  %v1575 = vsel %vm131, %v54, 0
  %v1578 = vsel %vm131, %v55, 0
  %v1581 = vsel %vm131, %v56, 0
  %1583 = vmatprep.subr.mxu0 0.0
  %1584 = vmatpush1.msra.mxu0 %v1543
  %1585 = vmatprep.subr.mxu0 0.0
  %1586 = vmatpush1.msra.mxu0 %v1544
  %1587 = vmatprep.subr.mxu0 0.0
  %1588 = vmatpush1.msra.mxu0 %v1545
  %1589 = vmatprep.subr.mxu0 0.0
  %1590 = vmatpush1.msra.mxu0 %v1546
  %1591 = vmatprep.subr.mxu0 0.0
  %1592 = vmatpush1.msra.mxu0 0.0
  %1593 = vmatprep.subr.mxu0 0.0
  %1594 = vmatpush1.msra.mxu0 0.0
  %1595 = vmatprep.subr.mxu0 0.0
  %1596 = vmatpush1.msra.mxu0 0.0
  %1597 = vmatprep.subr.mxu0 0.0
  %1598 = vmatpush1.msra.mxu0 0.0
  %1599 = vmatprep.subr.mxu0 0.0
  %1600 = vmatpush1.msra.mxu0 0.0
  %1601 = vmatprep.subr.mxu0 0.0
  %1602 = vmatpush1.msra.mxu0 0.0
  %1603 = vmatprep.subr.mxu0 0.0
  %1604 = vmatpush1.msra.mxu0 0.0
  %1605 = vmatprep.subr.mxu0 0.0
  %1606 = vmatpush1.msra.mxu0 0.0
  %1607 = vmatprep.subr.mxu0 0.0
  %1608 = vmatpush1.msra.mxu0 0.0
  %1609 = vmatprep.subr.mxu0 0.0
  %1610 = vmatpush1.msra.mxu0 0.0
  %1611 = vmatprep.subr.mxu0 0.0
  %1612 = vmatpush1.msra.mxu0 0.0
  %1613 = vmatprep.subr.mxu0 0.0
  %1614 = vmatpush1.msra.mxu0 0.0
  %1615 = vmatprep.subr.mxu0 0.0
  %1616 = vmatpush1.msra.mxu0 0.0
  %1617 = vmatprep.subr.mxu0 0.0
  %1618 = vmatpush1.msra.mxu0 0.0
  %1619 = vmatprep.subr.mxu0 0.0
  %1620 = vmatpush1.msra.mxu0 0.0
  %1621 = vmatprep.subr.mxu0 0.0
  %1622 = vmatpush1.msra.mxu0 0.0
  %1623 = vmatprep.subr.mxu0 0.0
  %1624 = vmatpush1.msra.mxu0 0.0
  %1625 = vmatprep.subr.mxu0 0.0
  %1626 = vmatpush1.msra.mxu0 0.0
  %1627 = vmatprep.subr.mxu0 0.0
  %1628 = vmatpush1.msra.mxu0 0.0
  %1629 = vmatprep.subr.mxu0 0.0
  %1630 = vmatpush1.msra.mxu0 0.0
  %1631 = vmatprep.subr.mxu0 0.0
  %1632 = vmatpush1.msra.mxu0 0.0
  %1633 = vmatprep.subr.mxu0 0.0
  %1634 = vmatpush1.msra.mxu0 0.0
  %1635 = vmatprep.subr.mxu0 0.0
  %1636 = vmatpush1.msra.mxu0 0.0
  %1637 = vmatprep.subr.mxu0 0.0
  %1638 = vmatpush1.msra.mxu0 0.0
  %1639 = vmatprep.subr.mxu0 0.0
  %1640 = vmatpush1.msra.mxu0 0.0
  %1641 = vmatprep.subr.mxu0 0.0
  %1642 = vmatpush1.msra.mxu0 0.0
  %1643 = vmatprep.subr.mxu0 0.0
  %1644 = vmatpush1.msra.mxu0 0.0
  %1645 = vmatprep.subr.mxu0 0.0
  %1646 = vmatpush1.msra.mxu0 0.0
  %1647 = vmatprep.mubr.f32.mxu0 0.0
  %1648 = vmatmul.mubr.f32.gmra.mrb[0].mxu0 %v1548
  %v1649 = vpop.f32.mrb[0].mxu0
  %v1650 = vadd.f32 0.0, %v1649
  %v1651 = vpop.f32.mrb[0].mxu0
  %1652 = vmatprep.mubr.f32.mxu0 0.0
  %1653 = vmatmul.mubr.f32.gmra.mrb[0].mxu0 %v1551
  %v1654 = vpop.f32.mrb[0].mxu0
  %v1655 = vadd.f32 0.0, %v1654
  %v1656 = vpop.f32.mrb[0].mxu0
  %1657 = vmatprep.mubr.f32.mxu0 0.0
  %1658 = vmatmul.mubr.f32.gmra.mrb[0].mxu0 %v1554
  %v1659 = vpop.f32.mrb[0].mxu0
  %v1660 = vadd.f32 0.0, %v1659
  %v1661 = vpop.f32.mrb[0].mxu0
  %1662 = vmatprep.mubr.f32.mxu0 0.0
  %1663 = vmatmul.mubr.f32.gmra.mrb[0].mxu0 %v1557
  %v1664 = vpop.f32.mrb[0].mxu0
  %v1665 = vadd.f32 0.0, %v1664
  %v1666 = vpop.f32.mrb[0].mxu0
  %1667 = vmatprep.mubr.f32.mxu0 0.0
  %1668 = vmatmul.mubr.f32.gmra.mrb[0].mxu0 %v1560
  %v1669 = vpop.f32.mrb[0].mxu0
  %v1670 = vadd.f32 0.0, %v1669
  %v1671 = vpop.f32.mrb[0].mxu0
  %1672 = vmatprep.mubr.f32.mxu0 0.0
  %1673 = vmatmul.mubr.f32.gmra.mrb[0].mxu0 %v1563
  %v1674 = vpop.f32.mrb[0].mxu0
  %v1675 = vadd.f32 0.0, %v1674
  %v1676 = vpop.f32.mrb[0].mxu0
  %1677 = vmatprep.mubr.f32.mxu0 0.0
  %1678 = vmatmul.mubr.f32.gmra.mrb[0].mxu0 %v1566
  %v1679 = vpop.f32.mrb[0].mxu0
  %v1680 = vadd.f32 0.0, %v1679
  %v1681 = vpop.f32.mrb[0].mxu0
  %1682 = vmatprep.mubr.f32.mxu0 0.0
  %1683 = vmatmul.mubr.f32.gmra.mrb[0].mxu0 %v1569
  %v1684 = vpop.f32.mrb[0].mxu0
  %v1685 = vadd.f32 0.0, %v1684
  %v1686 = vpop.f32.mrb[0].mxu0
  %1687 = vmatprep.mubr.f32.mxu0 0.0
  %1688 = vmatmul.mubr.f32.gmra.mrb[0].mxu0 %v1572
  %v1689 = vpop.f32.mrb[0].mxu0
  %v1690 = vadd.f32 0.0, %v1689
  %v1691 = vpop.f32.mrb[0].mxu0
  %1692 = vmatprep.mubr.f32.mxu0 0.0
  %1693 = vmatmul.mubr.f32.gmra.mrb[0].mxu0 %v1575
  %v1694 = vpop.f32.mrb[0].mxu0
  %v1695 = vadd.f32 0.0, %v1694
  %v1696 = vpop.f32.mrb[0].mxu0
  %1697 = vmatprep.mubr.f32.mxu0 0.0
  %1698 = vmatmul.mubr.f32.gmra.mrb[0].mxu0 %v1578
  %v1699 = vpop.f32.mrb[0].mxu0
  %v1700 = vadd.f32 0.0, %v1699
  %v1701 = vpop.f32.mrb[0].mxu0
  %1702 = vmatprep.mubr.f32.mxu0 0.0
  %1703 = vmatmul.mubr.f32.gmra.mrb[0].mxu0 %v1581
  %v1704 = vpop.f32.mrb[0].mxu0
  %v1705 = vadd.f32 0.0, %v1704
  %v1706 = vpop.f32.mrb[0].mxu0
  %1707 = vdwg.mxu0
  %v1709 = vsel %vm131, %v1650, 0
  %v1712 = vsel %vm131, %v1655, 0
  %v1715 = vsel %vm131, %v1660, 0
  %v1718 = vsel %vm131, %v1665, 0
  %1720 = vmatprep.subr.mxu0 0.0
  %1721 = vmatpush1.msra.mxu0 %v77
  %1722 = vmatprep.subr.mxu0 0.0
  %1723 = vmatpush1.msra.mxu0 %v79
  %1724 = vmatprep.subr.mxu0 0.0
  %1725 = vmatpush1.msra.mxu0 %v81
  %1726 = vmatprep.subr.mxu0 0.0
  %1727 = vmatpush1.msra.mxu0 %v82
  %1728 = vmatprep.subr.mxu0 0.0
  %1729 = vmatpush1.msra.mxu0 0.0
  %1730 = vmatprep.subr.mxu0 0.0
  %1731 = vmatpush1.msra.mxu0 0.0
  %1732 = vmatprep.subr.mxu0 0.0
  %1733 = vmatpush1.msra.mxu0 0.0
  %1734 = vmatprep.subr.mxu0 0.0
  %1735 = vmatpush1.msra.mxu0 0.0
  %1736 = vmatprep.subr.mxu0 0.0
  %1737 = vmatpush1.msra.mxu0 0.0
  %1738 = vmatprep.subr.mxu0 0.0
  %1739 = vmatpush1.msra.mxu0 0.0
  %1740 = vmatprep.subr.mxu0 0.0
  %1741 = vmatpush1.msra.mxu0 0.0
  %1742 = vmatprep.subr.mxu0 0.0
  %1743 = vmatpush1.msra.mxu0 0.0
  %1744 = vmatprep.subr.mxu0 0.0
  %1745 = vmatpush1.msra.mxu0 0.0
  %1746 = vmatprep.subr.mxu0 0.0
  %1747 = vmatpush1.msra.mxu0 0.0
  %1748 = vmatprep.subr.mxu0 0.0
  %1749 = vmatpush1.msra.mxu0 0.0
  %1750 = vmatprep.subr.mxu0 0.0
  %1751 = vmatpush1.msra.mxu0 0.0
  %1752 = vmatprep.subr.mxu0 0.0
  %1753 = vmatpush1.msra.mxu0 0.0
  %1754 = vmatprep.subr.mxu0 0.0
  %1755 = vmatpush1.msra.mxu0 0.0
  %1756 = vmatprep.subr.mxu0 0.0
  %1757 = vmatpush1.msra.mxu0 0.0
  %1758 = vmatprep.subr.mxu0 0.0
  %1759 = vmatpush1.msra.mxu0 0.0
  %1760 = vmatprep.subr.mxu0 0.0
  %1761 = vmatpush1.msra.mxu0 0.0
  %1762 = vmatprep.subr.mxu0 0.0
  %1763 = vmatpush1.msra.mxu0 0.0
  %1764 = vmatprep.subr.mxu0 0.0
  %1765 = vmatpush1.msra.mxu0 0.0
  %1766 = vmatprep.subr.mxu0 0.0
  %1767 = vmatpush1.msra.mxu0 0.0
  %1768 = vmatprep.subr.mxu0 0.0
  %1769 = vmatpush1.msra.mxu0 0.0
  %1770 = vmatprep.subr.mxu0 0.0
  %1771 = vmatpush1.msra.mxu0 0.0
  %1772 = vmatprep.subr.mxu0 0.0
  %1773 = vmatpush1.msra.mxu0 0.0
  %1774 = vmatprep.subr.mxu0 0.0
  %1775 = vmatpush1.msra.mxu0 0.0
  %1776 = vmatprep.subr.mxu0 0.0
  %1777 = vmatpush1.msra.mxu0 0.0
  %1778 = vmatprep.subr.mxu0 0.0
  %1779 = vmatpush1.msra.mxu0 0.0
  %1780 = vmatprep.subr.mxu0 0.0
  %1781 = vmatpush1.msra.mxu0 0.0
  %1782 = vmatprep.subr.mxu0 0.0
  %1783 = vmatpush1.msra.mxu0 0.0
  %1784 = vmatprep.mubr.f32.mxu0 0.0
  %1785 = vmatmul.mubr.f32.gmra.mrb[0].mxu0 %v1709
  %v1786 = vpop.f32.mrb[0].mxu0
  %v1787 = vadd.f32 %v1670, %v1786
  %v1788 = vpop.f32.mrb[0].mxu0
  %1789 = vmatprep.mubr.f32.mxu0 0.0
  %1790 = vmatmul.mubr.f32.gmra.mrb[0].mxu0 %v1712
  %v1791 = vpop.f32.mrb[0].mxu0
  %v1792 = vadd.f32 %v1675, %v1791
  %v1793 = vpop.f32.mrb[0].mxu0
  %1794 = vmatprep.mubr.f32.mxu0 0.0
  %1795 = vmatmul.mubr.f32.gmra.mrb[0].mxu0 %v1715
  %v1796 = vpop.f32.mrb[0].mxu0
  %v1797 = vadd.f32 %v1680, %v1796
  %v1798 = vpop.f32.mrb[0].mxu0
  %1799 = vmatprep.mubr.f32.mxu0 0.0
  %1800 = vmatmul.mubr.f32.gmra.mrb[0].mxu0 %v1718
  %v1801 = vpop.f32.mrb[0].mxu0
  %v1802 = vadd.f32 %v1685, %v1801
  %v1803 = vpop.f32.mrb[0].mxu0
  %1804 = vdwg.mxu0
  %v1806 = vsel %vm131, %v1690, 0
  %v1809 = vsel %vm131, %v1695, 0
  %v1812 = vsel %vm131, %v1700, 0
  %v1815 = vsel %vm131, %v1705, 0
  %1817 = vmatprep.subr.mxu0 0.0
  %1818 = vmatpush1.msra.mxu0 %v395
  %1819 = vmatprep.subr.mxu0 0.0
  %1820 = vmatpush1.msra.mxu0 %v397
  %1821 = vmatprep.subr.mxu0 0.0
  %1822 = vmatpush1.msra.mxu0 %v399
  %1823 = vmatprep.subr.mxu0 0.0
  %1824 = vmatpush1.msra.mxu0 %v401
  %1825 = vmatprep.subr.mxu0 0.0
  %1826 = vmatpush1.msra.mxu0 0.0
  %1827 = vmatprep.subr.mxu0 0.0
  %1828 = vmatpush1.msra.mxu0 0.0
  %1829 = vmatprep.subr.mxu0 0.0
  %1830 = vmatpush1.msra.mxu0 0.0
  %1831 = vmatprep.subr.mxu0 0.0
  %1832 = vmatpush1.msra.mxu0 0.0
  %1833 = vmatprep.subr.mxu0 0.0
  %1834 = vmatpush1.msra.mxu0 0.0
  %1835 = vmatprep.subr.mxu0 0.0
  %1836 = vmatpush1.msra.mxu0 0.0
  %1837 = vmatprep.subr.mxu0 0.0
  %1838 = vmatpush1.msra.mxu0 0.0
  %1839 = vmatprep.subr.mxu0 0.0
  %1840 = vmatpush1.msra.mxu0 0.0
  %1841 = vmatprep.subr.mxu0 0.0
  %1842 = vmatpush1.msra.mxu0 0.0
  %1843 = vmatprep.subr.mxu0 0.0
  %1844 = vmatpush1.msra.mxu0 0.0
  %1845 = vmatprep.subr.mxu0 0.0
  %1846 = vmatpush1.msra.mxu0 0.0
  %1847 = vmatprep.subr.mxu0 0.0
  %1848 = vmatpush1.msra.mxu0 0.0
  %1849 = vmatprep.subr.mxu0 0.0
  %1850 = vmatpush1.msra.mxu0 0.0
  %1851 = vmatprep.subr.mxu0 0.0
  %1852 = vmatpush1.msra.mxu0 0.0
  %1853 = vmatprep.subr.mxu0 0.0
  %1854 = vmatpush1.msra.mxu0 0.0
  %1855 = vmatprep.subr.mxu0 0.0
  %1856 = vmatpush1.msra.mxu0 0.0
  %1857 = vmatprep.subr.mxu0 0.0
  %1858 = vmatpush1.msra.mxu0 0.0
  %1859 = vmatprep.subr.mxu0 0.0
  %1860 = vmatpush1.msra.mxu0 0.0
  %1861 = vmatprep.subr.mxu0 0.0
  %1862 = vmatpush1.msra.mxu0 0.0
  %1863 = vmatprep.subr.mxu0 0.0
  %1864 = vmatpush1.msra.mxu0 0.0
  %1865 = vmatprep.subr.mxu0 0.0
  %1866 = vmatpush1.msra.mxu0 0.0
  %1867 = vmatprep.subr.mxu0 0.0
  %1868 = vmatpush1.msra.mxu0 0.0
  %1869 = vmatprep.subr.mxu0 0.0
  %1870 = vmatpush1.msra.mxu0 0.0
  %1871 = vmatprep.subr.mxu0 0.0
  %1872 = vmatpush1.msra.mxu0 0.0
  %1873 = vmatprep.subr.mxu0 0.0
  %1874 = vmatpush1.msra.mxu0 0.0
  %1875 = vmatprep.subr.mxu0 0.0
  %1876 = vmatpush1.msra.mxu0 0.0
  %1877 = vmatprep.subr.mxu0 0.0
  %1878 = vmatpush1.msra.mxu0 0.0
  %1879 = vmatprep.subr.mxu0 0.0
  %1880 = vmatpush1.msra.mxu0 0.0
  %1881 = vmatprep.mubr.f32.mxu0 0.0
  %1882 = vmatmul.mubr.f32.gmra.mrb[0].mxu0 %v1806
  %v1883 = vpop.f32.mrb[0].mxu0
  %v1884 = vadd.f32 0.0, %v1883
  %v1885 = vpop.f32.mrb[0].mxu0
  %1886 = vmatprep.mubr.f32.mxu0 0.0
  %1887 = vmatmul.mubr.f32.gmra.mrb[0].mxu0 %v1809
  %v1888 = vpop.f32.mrb[0].mxu0
  %v1889 = vadd.f32 0.0, %v1888
  %v1890 = vpop.f32.mrb[0].mxu0
  %1891 = vmatprep.mubr.f32.mxu0 0.0
  %1892 = vmatmul.mubr.f32.gmra.mrb[0].mxu0 %v1812
  %v1893 = vpop.f32.mrb[0].mxu0
  %v1894 = vadd.f32 0.0, %v1893
  %v1895 = vpop.f32.mrb[0].mxu0
  %1896 = vmatprep.mubr.f32.mxu0 0.0
  %1897 = vmatmul.mubr.f32.gmra.mrb[0].mxu0 %v1815
  %v1898 = vpop.f32.mrb[0].mxu0
  %v1899 = vadd.f32 0.0, %v1898
  %v1900 = vpop.f32.mrb[0].mxu0
  %1901 = vdwg.mxu0
  %v1902 = vadd.f32 %v1787, %v1884
  %v1903 = vadd.f32 %v1792, %v1889
  %v1904 = vadd.f32 %v1797, %v1894
  %v1905 = vadd.f32 %v1802, %v1899
  %1906 = vset.pattern.permute.xlu0 40
  %1907 = vperm.xlu0 %1906, %v70
  %v1908 = vpop.permute.xlu0 %1907
  %1910 = vset.pattern.permute.xlu0 40
  %1911 = vperm.xlu0 %1910, %v72
  %v1912 = vpop.permute.xlu0 %1911
  %1914 = vset.pattern.permute.xlu0 40
  %1915 = vperm.xlu0 %1914, %v74
  %v1916 = vpop.permute.xlu0 %1915
  %1918 = vset.pattern.permute.xlu0 40
  %1919 = vperm.xlu0 %1918, %v76
  %v1920 = vpop.permute.xlu0 %1919
  %v1922 = vmul.f32 %v1902, %v1908
  %v1923 = vmul.f32 %v1903, %v1912
  %v1924 = vmul.f32 %v1904, %v1916
  %v1925 = vmul.f32 %v1905, %v1920
  %1926 = vset.pattern.permute.xlu0 41
  %1927 = vperm.xlu0 %1926, %v70
  %v1928 = vpop.permute.xlu0 %1927
  %1930 = vset.pattern.permute.xlu0 41
  %1931 = vperm.xlu0 %1930, %v72
  %v1932 = vpop.permute.xlu0 %1931
  %1934 = vset.pattern.permute.xlu0 41
  %1935 = vperm.xlu0 %1934, %v74
  %v1936 = vpop.permute.xlu0 %1935
  %1938 = vset.pattern.permute.xlu0 41
  %1939 = vperm.xlu0 %1938, %v76
  %v1940 = vpop.permute.xlu0 %1939
  %v1942 = vadd.f32 %v1922, %v1928
  %v1943 = vadd.f32 %v1923, %v1932
  %v1944 = vadd.f32 %v1924, %v1936
  %v1945 = vadd.f32 %v1925, %v1940
  %v1946 = vmax.f32 %v1942, 0.0
  %v1947 = vmax.f32 %v1943, 0.0
  %v1948 = vmax.f32 %v1944, 0.0
  %v1949 = vmax.f32 %v1945, 0.0
  %v1951 = vsel %vm131, %v57, 0
  %v1954 = vsel %vm131, %v58, 0
  %v1957 = vsel %vm131, %v59, 0
  %v1960 = vsel %vm131, %v60, 0
  %v1963 = vsel %vm131, %v61, 0
  %v1966 = vsel %vm131, %v62, 0
  %v1969 = vsel %vm131, %v63, 0
  %v1972 = vsel %vm131, %v64, 0
  %v1975 = vsel %vm131, %v65, 0
  %v1978 = vsel %vm131, %v66, 0
  %v1981 = vsel %vm131, %v67, 0
  %v1984 = vsel %vm131, %v68, 0
  %1986 = vmatprep.subr.mxu0 0.0
  %1987 = vmatpush1.msra.mxu0 %v1946
  %1988 = vmatprep.subr.mxu0 0.0
  %1989 = vmatpush1.msra.mxu0 %v1947
  %1990 = vmatprep.subr.mxu0 0.0
  %1991 = vmatpush1.msra.mxu0 %v1948
  %1992 = vmatprep.subr.mxu0 0.0
  %1993 = vmatpush1.msra.mxu0 %v1949
  %1994 = vmatprep.subr.mxu0 0.0
  %1995 = vmatpush1.msra.mxu0 0.0
  %1996 = vmatprep.subr.mxu0 0.0
  %1997 = vmatpush1.msra.mxu0 0.0
  %1998 = vmatprep.subr.mxu0 0.0
  %1999 = vmatpush1.msra.mxu0 0.0
  %2000 = vmatprep.subr.mxu0 0.0
  %2001 = vmatpush1.msra.mxu0 0.0
  %2002 = vmatprep.subr.mxu0 0.0
  %2003 = vmatpush1.msra.mxu0 0.0
  %2004 = vmatprep.subr.mxu0 0.0
  %2005 = vmatpush1.msra.mxu0 0.0
  %2006 = vmatprep.subr.mxu0 0.0
  %2007 = vmatpush1.msra.mxu0 0.0
  %2008 = vmatprep.subr.mxu0 0.0
  %2009 = vmatpush1.msra.mxu0 0.0
  %2010 = vmatprep.subr.mxu0 0.0
  %2011 = vmatpush1.msra.mxu0 0.0
  %2012 = vmatprep.subr.mxu0 0.0
  %2013 = vmatpush1.msra.mxu0 0.0
  %2014 = vmatprep.subr.mxu0 0.0
  %2015 = vmatpush1.msra.mxu0 0.0
  %2016 = vmatprep.subr.mxu0 0.0
  %2017 = vmatpush1.msra.mxu0 0.0
  %2018 = vmatprep.subr.mxu0 0.0
  %2019 = vmatpush1.msra.mxu0 0.0
  %2020 = vmatprep.subr.mxu0 0.0
  %2021 = vmatpush1.msra.mxu0 0.0
  %2022 = vmatprep.subr.mxu0 0.0
  %2023 = vmatpush1.msra.mxu0 0.0
  %2024 = vmatprep.subr.mxu0 0.0
  %2025 = vmatpush1.msra.mxu0 0.0
  %2026 = vmatprep.subr.mxu0 0.0
  %2027 = vmatpush1.msra.mxu0 0.0
  %2028 = vmatprep.subr.mxu0 0.0
  %2029 = vmatpush1.msra.mxu0 0.0
  %2030 = vmatprep.subr.mxu0 0.0
  %2031 = vmatpush1.msra.mxu0 0.0
  %2032 = vmatprep.subr.mxu0 0.0
  %2033 = vmatpush1.msra.mxu0 0.0
  %2034 = vmatprep.subr.mxu0 0.0
  %2035 = vmatpush1.msra.mxu0 0.0
  %2036 = vmatprep.subr.mxu0 0.0
  %2037 = vmatpush1.msra.mxu0 0.0
  %2038 = vmatprep.subr.mxu0 0.0
  %2039 = vmatpush1.msra.mxu0 0.0
  %2040 = vmatprep.subr.mxu0 0.0
  %2041 = vmatpush1.msra.mxu0 0.0
  %2042 = vmatprep.subr.mxu0 0.0
  %2043 = vmatpush1.msra.mxu0 0.0
  %2044 = vmatprep.subr.mxu0 0.0
  %2045 = vmatpush1.msra.mxu0 0.0
  %2046 = vmatprep.subr.mxu0 0.0
  %2047 = vmatpush1.msra.mxu0 0.0
  %2048 = vmatprep.subr.mxu0 0.0
  %2049 = vmatpush1.msra.mxu0 0.0
  %2050 = vmatprep.mubr.f32.mxu0 0.0
  %2051 = vmatmul.mubr.f32.gmra.mrb[0].mxu0 %v1951
  %v2052 = vpop.f32.mrb[0].mxu0
  %v2053 = vadd.f32 0.0, %v2052
  %v2054 = vpop.f32.mrb[0].mxu0
  %2055 = vmatprep.mubr.f32.mxu0 0.0
  %2056 = vmatmul.mubr.f32.gmra.mrb[0].mxu0 %v1954
  %v2057 = vpop.f32.mrb[0].mxu0
  %v2058 = vadd.f32 0.0, %v2057
  %v2059 = vpop.f32.mrb[0].mxu0
  %2060 = vmatprep.mubr.f32.mxu0 0.0
  %2061 = vmatmul.mubr.f32.gmra.mrb[0].mxu0 %v1957
  %v2062 = vpop.f32.mrb[0].mxu0
  %v2063 = vadd.f32 0.0, %v2062
  %v2064 = vpop.f32.mrb[0].mxu0
  %2065 = vmatprep.mubr.f32.mxu0 0.0
  %2066 = vmatmul.mubr.f32.gmra.mrb[0].mxu0 %v1960
  %v2067 = vpop.f32.mrb[0].mxu0
  %v2068 = vadd.f32 0.0, %v2067
  %v2069 = vpop.f32.mrb[0].mxu0
  %2070 = vmatprep.mubr.f32.mxu0 0.0
  %2071 = vmatmul.mubr.f32.gmra.mrb[0].mxu0 %v1963
  %v2072 = vpop.f32.mrb[0].mxu0
  %v2073 = vadd.f32 0.0, %v2072
  %v2074 = vpop.f32.mrb[0].mxu0
  %2075 = vmatprep.mubr.f32.mxu0 0.0
  %2076 = vmatmul.mubr.f32.gmra.mrb[0].mxu0 %v1966
  %v2077 = vpop.f32.mrb[0].mxu0
  %v2078 = vadd.f32 0.0, %v2077
  %v2079 = vpop.f32.mrb[0].mxu0
  %2080 = vmatprep.mubr.f32.mxu0 0.0
  %2081 = vmatmul.mubr.f32.gmra.mrb[0].mxu0 %v1969
  %v2082 = vpop.f32.mrb[0].mxu0
  %v2083 = vadd.f32 0.0, %v2082
  %v2084 = vpop.f32.mrb[0].mxu0
  %2085 = vmatprep.mubr.f32.mxu0 0.0
  %2086 = vmatmul.mubr.f32.gmra.mrb[0].mxu0 %v1972
  %v2087 = vpop.f32.mrb[0].mxu0
  %v2088 = vadd.f32 0.0, %v2087
  %v2089 = vpop.f32.mrb[0].mxu0
  %2090 = vmatprep.mubr.f32.mxu0 0.0
  %2091 = vmatmul.mubr.f32.gmra.mrb[0].mxu0 %v1975
  %v2092 = vpop.f32.mrb[0].mxu0
  %v2093 = vadd.f32 0.0, %v2092
  %v2094 = vpop.f32.mrb[0].mxu0
  %2095 = vmatprep.mubr.f32.mxu0 0.0
  %2096 = vmatmul.mubr.f32.gmra.mrb[0].mxu0 %v1978
  %v2097 = vpop.f32.mrb[0].mxu0
  %v2098 = vadd.f32 0.0, %v2097
  %v2099 = vpop.f32.mrb[0].mxu0
  %2100 = vmatprep.mubr.f32.mxu0 0.0
  %2101 = vmatmul.mubr.f32.gmra.mrb[0].mxu0 %v1981
  %v2102 = vpop.f32.mrb[0].mxu0
  %v2103 = vadd.f32 0.0, %v2102
  %v2104 = vpop.f32.mrb[0].mxu0
  %2105 = vmatprep.mubr.f32.mxu0 0.0
  %2106 = vmatmul.mubr.f32.gmra.mrb[0].mxu0 %v1984
  %v2107 = vpop.f32.mrb[0].mxu0
  %v2108 = vadd.f32 0.0, %v2107
  %v2109 = vpop.f32.mrb[0].mxu0
  %2110 = vdwg.mxu0
  %v2112 = vsel %vm131, %v2053, 0
  %v2115 = vsel %vm131, %v2058, 0
  %v2118 = vsel %vm131, %v2063, 0
  %v2121 = vsel %vm131, %v2068, 0
  %2123 = vmatprep.subr.mxu0 0.0
  %2124 = vmatpush1.msra.mxu0 %v77
  %2125 = vmatprep.subr.mxu0 0.0
  %2126 = vmatpush1.msra.mxu0 %v79
  %2127 = vmatprep.subr.mxu0 0.0
  %2128 = vmatpush1.msra.mxu0 %v81
  %2129 = vmatprep.subr.mxu0 0.0
  %2130 = vmatpush1.msra.mxu0 %v82
  %2131 = vmatprep.subr.mxu0 0.0
  %2132 = vmatpush1.msra.mxu0 0.0
  %2133 = vmatprep.subr.mxu0 0.0
  %2134 = vmatpush1.msra.mxu0 0.0
  %2135 = vmatprep.subr.mxu0 0.0
  %2136 = vmatpush1.msra.mxu0 0.0
  %2137 = vmatprep.subr.mxu0 0.0
  %2138 = vmatpush1.msra.mxu0 0.0
  %2139 = vmatprep.subr.mxu0 0.0
  %2140 = vmatpush1.msra.mxu0 0.0
  %2141 = vmatprep.subr.mxu0 0.0
  %2142 = vmatpush1.msra.mxu0 0.0
  %2143 = vmatprep.subr.mxu0 0.0
  %2144 = vmatpush1.msra.mxu0 0.0
  %2145 = vmatprep.subr.mxu0 0.0
  %2146 = vmatpush1.msra.mxu0 0.0
  %2147 = vmatprep.subr.mxu0 0.0
  %2148 = vmatpush1.msra.mxu0 0.0
  %2149 = vmatprep.subr.mxu0 0.0
  %2150 = vmatpush1.msra.mxu0 0.0
  %2151 = vmatprep.subr.mxu0 0.0
  %2152 = vmatpush1.msra.mxu0 0.0
  %2153 = vmatprep.subr.mxu0 0.0
  %2154 = vmatpush1.msra.mxu0 0.0
  %2155 = vmatprep.subr.mxu0 0.0
  %2156 = vmatpush1.msra.mxu0 0.0
  %2157 = vmatprep.subr.mxu0 0.0
  %2158 = vmatpush1.msra.mxu0 0.0
  %2159 = vmatprep.subr.mxu0 0.0
  %2160 = vmatpush1.msra.mxu0 0.0
  %2161 = vmatprep.subr.mxu0 0.0
  %2162 = vmatpush1.msra.mxu0 0.0
  %2163 = vmatprep.subr.mxu0 0.0
  %2164 = vmatpush1.msra.mxu0 0.0
  %2165 = vmatprep.subr.mxu0 0.0
  %2166 = vmatpush1.msra.mxu0 0.0
  %2167 = vmatprep.subr.mxu0 0.0
  %2168 = vmatpush1.msra.mxu0 0.0
  %2169 = vmatprep.subr.mxu0 0.0
  %2170 = vmatpush1.msra.mxu0 0.0
  %2171 = vmatprep.subr.mxu0 0.0
  %2172 = vmatpush1.msra.mxu0 0.0
  %2173 = vmatprep.subr.mxu0 0.0
  %2174 = vmatpush1.msra.mxu0 0.0
  %2175 = vmatprep.subr.mxu0 0.0
  %2176 = vmatpush1.msra.mxu0 0.0
  %2177 = vmatprep.subr.mxu0 0.0
  %2178 = vmatpush1.msra.mxu0 0.0
  %2179 = vmatprep.subr.mxu0 0.0
  %2180 = vmatpush1.msra.mxu0 0.0
  %2181 = vmatprep.subr.mxu0 0.0
  %2182 = vmatpush1.msra.mxu0 0.0
  %2183 = vmatprep.subr.mxu0 0.0
  %2184 = vmatpush1.msra.mxu0 0.0
  %2185 = vmatprep.subr.mxu0 0.0
  %2186 = vmatpush1.msra.mxu0 0.0
  %2187 = vmatprep.mubr.f32.mxu0 0.0
  %2188 = vmatmul.mubr.f32.gmra.mrb[0].mxu0 %v2112
  %v2189 = vpop.f32.mrb[0].mxu0
  %v2190 = vadd.f32 %v2073, %v2189
  %v2191 = vpop.f32.mrb[0].mxu0
  %2192 = vmatprep.mubr.f32.mxu0 0.0
  %2193 = vmatmul.mubr.f32.gmra.mrb[0].mxu0 %v2115
  %v2194 = vpop.f32.mrb[0].mxu0
  %v2195 = vadd.f32 %v2078, %v2194
  %v2196 = vpop.f32.mrb[0].mxu0
  %2197 = vmatprep.mubr.f32.mxu0 0.0
  %2198 = vmatmul.mubr.f32.gmra.mrb[0].mxu0 %v2118
  %v2199 = vpop.f32.mrb[0].mxu0
  %v2200 = vadd.f32 %v2083, %v2199
  %v2201 = vpop.f32.mrb[0].mxu0
  %2202 = vmatprep.mubr.f32.mxu0 0.0
  %2203 = vmatmul.mubr.f32.gmra.mrb[0].mxu0 %v2121
  %v2204 = vpop.f32.mrb[0].mxu0
  %v2205 = vadd.f32 %v2088, %v2204
  %v2206 = vpop.f32.mrb[0].mxu0
  %2207 = vdwg.mxu0
  %v2209 = vsel %vm131, %v2093, 0
  %v2212 = vsel %vm131, %v2098, 0
  %v2215 = vsel %vm131, %v2103, 0
  %v2218 = vsel %vm131, %v2108, 0
  %2220 = vmatprep.subr.mxu0 0.0
  %2221 = vmatpush1.msra.mxu0 %v395
  %2222 = vmatprep.subr.mxu0 0.0
  %2223 = vmatpush1.msra.mxu0 %v397
  %2224 = vmatprep.subr.mxu0 0.0
  %2225 = vmatpush1.msra.mxu0 %v399
  %2226 = vmatprep.subr.mxu0 0.0
  %2227 = vmatpush1.msra.mxu0 %v401
  %2228 = vmatprep.subr.mxu0 0.0
  %2229 = vmatpush1.msra.mxu0 0.0
  %2230 = vmatprep.subr.mxu0 0.0
  %2231 = vmatpush1.msra.mxu0 0.0
  %2232 = vmatprep.subr.mxu0 0.0
  %2233 = vmatpush1.msra.mxu0 0.0
  %2234 = vmatprep.subr.mxu0 0.0
  %2235 = vmatpush1.msra.mxu0 0.0
  %2236 = vmatprep.subr.mxu0 0.0
  %2237 = vmatpush1.msra.mxu0 0.0
  %2238 = vmatprep.subr.mxu0 0.0
  %2239 = vmatpush1.msra.mxu0 0.0
  %2240 = vmatprep.subr.mxu0 0.0
  %2241 = vmatpush1.msra.mxu0 0.0
  %2242 = vmatprep.subr.mxu0 0.0
  %2243 = vmatpush1.msra.mxu0 0.0
  %2244 = vmatprep.subr.mxu0 0.0
  %2245 = vmatpush1.msra.mxu0 0.0
  %2246 = vmatprep.subr.mxu0 0.0
  %2247 = vmatpush1.msra.mxu0 0.0
  %2248 = vmatprep.subr.mxu0 0.0
  %2249 = vmatpush1.msra.mxu0 0.0
  %2250 = vmatprep.subr.mxu0 0.0
  %2251 = vmatpush1.msra.mxu0 0.0
  %2252 = vmatprep.subr.mxu0 0.0
  %2253 = vmatpush1.msra.mxu0 0.0
  %2254 = vmatprep.subr.mxu0 0.0
  %2255 = vmatpush1.msra.mxu0 0.0
  %2256 = vmatprep.subr.mxu0 0.0
  %2257 = vmatpush1.msra.mxu0 0.0
  %2258 = vmatprep.subr.mxu0 0.0
  %2259 = vmatpush1.msra.mxu0 0.0
  %2260 = vmatprep.subr.mxu0 0.0
  %2261 = vmatpush1.msra.mxu0 0.0
  %2262 = vmatprep.subr.mxu0 0.0
  %2263 = vmatpush1.msra.mxu0 0.0
  %2264 = vmatprep.subr.mxu0 0.0
  %2265 = vmatpush1.msra.mxu0 0.0
  %2266 = vmatprep.subr.mxu0 0.0
  %2267 = vmatpush1.msra.mxu0 0.0
  %2268 = vmatprep.subr.mxu0 0.0
  %2269 = vmatpush1.msra.mxu0 0.0
  %2270 = vmatprep.subr.mxu0 0.0
  %2271 = vmatpush1.msra.mxu0 0.0
  %2272 = vmatprep.subr.mxu0 0.0
  %2273 = vmatpush1.msra.mxu0 0.0
  %2274 = vmatprep.subr.mxu0 0.0
  %2275 = vmatpush1.msra.mxu0 0.0
  %2276 = vmatprep.subr.mxu0 0.0
  %2277 = vmatpush1.msra.mxu0 0.0
  %2278 = vmatprep.subr.mxu0 0.0
  %2279 = vmatpush1.msra.mxu0 0.0
  %2280 = vmatprep.subr.mxu0 0.0
  %2281 = vmatpush1.msra.mxu0 0.0
  %2282 = vmatprep.subr.mxu0 0.0
  %2283 = vmatpush1.msra.mxu0 0.0
  %2284 = vmatprep.mubr.f32.mxu0 0.0
  %2285 = vmatmul.mubr.f32.gmra.mrb[0].mxu0 %v2209
  %v2286 = vpop.f32.mrb[0].mxu0
  %v2287 = vadd.f32 0.0, %v2286
  %v2288 = vpop.f32.mrb[0].mxu0
  %2289 = vmatprep.mubr.f32.mxu0 0.0
  %2290 = vmatmul.mubr.f32.gmra.mrb[0].mxu0 %v2212
  %v2291 = vpop.f32.mrb[0].mxu0
  %v2292 = vadd.f32 0.0, %v2291
  %v2293 = vpop.f32.mrb[0].mxu0
  %2294 = vmatprep.mubr.f32.mxu0 0.0
  %2295 = vmatmul.mubr.f32.gmra.mrb[0].mxu0 %v2215
  %v2296 = vpop.f32.mrb[0].mxu0
  %v2297 = vadd.f32 0.0, %v2296
  %v2298 = vpop.f32.mrb[0].mxu0
  %2299 = vmatprep.mubr.f32.mxu0 0.0
  %2300 = vmatmul.mubr.f32.gmra.mrb[0].mxu0 %v2218
  %v2301 = vpop.f32.mrb[0].mxu0
  %v2302 = vadd.f32 0.0, %v2301
  %v2303 = vpop.f32.mrb[0].mxu0
  %2304 = vdwg.mxu0
  %v2305 = vadd.f32 %v2190, %v2287
  %v2306 = vadd.f32 %v2195, %v2292
  %v2307 = vadd.f32 %v2200, %v2297
  %v2308 = vadd.f32 %v2205, %v2302
  %2309 = vrot.lane.b32.xlu0 %v77, 16
  %v2310 = vpop.permute.xlu0 %2309
  %2311 = vrot.lane.b32.xlu0 %v79, 16
  %v2312 = vpop.permute.xlu0 %2311
  %2313 = vrot.lane.b32.xlu0 %v81, 16
  %v2314 = vpop.permute.xlu0 %2313
  %2315 = vrot.lane.b32.xlu0 %v82, 16
  %v2316 = vpop.permute.xlu0 %2315
  %v2322 = vsel %vm131, %v2305, 0
  %v2325 = vsel %vm131, %v2306, 0
  %v2328 = vsel %vm131, %v2307, 0
  %v2331 = vsel %vm131, %v2308, 0
  %2333 = vmatprep.subr.mxu0 0.0
  %2334 = vmatpush1.msra.mxu0 %v2310
  %2335 = vmatprep.subr.mxu0 0.0
  %2336 = vmatpush1.msra.mxu0 %v2312
  %2337 = vmatprep.subr.mxu0 0.0
  %2338 = vmatpush1.msra.mxu0 %v2314
  %2339 = vmatprep.subr.mxu0 0.0
  %2340 = vmatpush1.msra.mxu0 %v2316
  %2341 = vmatprep.subr.mxu0 0.0
  %2342 = vmatpush1.msra.mxu0 0.0
  %2343 = vmatprep.subr.mxu0 0.0
  %2344 = vmatpush1.msra.mxu0 0.0
  %2345 = vmatprep.subr.mxu0 0.0
  %2346 = vmatpush1.msra.mxu0 0.0
  %2347 = vmatprep.subr.mxu0 0.0
  %2348 = vmatpush1.msra.mxu0 0.0
  %2349 = vmatprep.subr.mxu0 0.0
  %2350 = vmatpush1.msra.mxu0 0.0
  %2351 = vmatprep.subr.mxu0 0.0
  %2352 = vmatpush1.msra.mxu0 0.0
  %2353 = vmatprep.subr.mxu0 0.0
  %2354 = vmatpush1.msra.mxu0 0.0
  %2355 = vmatprep.subr.mxu0 0.0
  %2356 = vmatpush1.msra.mxu0 0.0
  %2357 = vmatprep.subr.mxu0 0.0
  %2358 = vmatpush1.msra.mxu0 0.0
  %2359 = vmatprep.subr.mxu0 0.0
  %2360 = vmatpush1.msra.mxu0 0.0
  %2361 = vmatprep.subr.mxu0 0.0
  %2362 = vmatpush1.msra.mxu0 0.0
  %2363 = vmatprep.subr.mxu0 0.0
  %2364 = vmatpush1.msra.mxu0 0.0
  %2365 = vmatprep.subr.mxu0 0.0
  %2366 = vmatpush1.msra.mxu0 0.0
  %2367 = vmatprep.subr.mxu0 0.0
  %2368 = vmatpush1.msra.mxu0 0.0
  %2369 = vmatprep.subr.mxu0 0.0
  %2370 = vmatpush1.msra.mxu0 0.0
  %2371 = vmatprep.subr.mxu0 0.0
  %2372 = vmatpush1.msra.mxu0 0.0
  %2373 = vmatprep.subr.mxu0 0.0
  %2374 = vmatpush1.msra.mxu0 0.0
  %2375 = vmatprep.subr.mxu0 0.0
  %2376 = vmatpush1.msra.mxu0 0.0
  %2377 = vmatprep.subr.mxu0 0.0
  %2378 = vmatpush1.msra.mxu0 0.0
  %2379 = vmatprep.subr.mxu0 0.0
  %2380 = vmatpush1.msra.mxu0 0.0
  %2381 = vmatprep.subr.mxu0 0.0
  %2382 = vmatpush1.msra.mxu0 0.0
  %2383 = vmatprep.subr.mxu0 0.0
  %2384 = vmatpush1.msra.mxu0 0.0
  %2385 = vmatprep.subr.mxu0 0.0
  %2386 = vmatpush1.msra.mxu0 0.0
  %2387 = vmatprep.subr.mxu0 0.0
  %2388 = vmatpush1.msra.mxu0 0.0
  %2389 = vmatprep.subr.mxu0 0.0
  %2390 = vmatpush1.msra.mxu0 0.0
  %2391 = vmatprep.subr.mxu0 0.0
  %2392 = vmatpush1.msra.mxu0 0.0
  %2393 = vmatprep.subr.mxu0 0.0
  %2394 = vmatpush1.msra.mxu0 0.0
  %2395 = vmatprep.subr.mxu0 0.0
  %2396 = vmatpush1.msra.mxu0 0.0
  %2397 = vmatprep.mubr.f32.mxu0 0.0
  %2398 = vmatmul.mubr.f32.gmra.mrb[0].mxu0 %v2322
  %v2399 = vpop.f32.mrb[0].mxu0
  %v2400 = vadd.f32 0.0, %v2399
  %v2401 = vpop.f32.mrb[0].mxu0
  %2402 = vmatprep.mubr.f32.mxu0 0.0
  %2403 = vmatmul.mubr.f32.gmra.mrb[0].mxu0 %v2325
  %v2404 = vpop.f32.mrb[0].mxu0
  %v2405 = vadd.f32 0.0, %v2404
  %v2406 = vpop.f32.mrb[0].mxu0
  %2407 = vmatprep.mubr.f32.mxu0 0.0
  %2408 = vmatmul.mubr.f32.gmra.mrb[0].mxu0 %v2328
  %v2409 = vpop.f32.mrb[0].mxu0
  %v2410 = vadd.f32 0.0, %v2409
  %v2411 = vpop.f32.mrb[0].mxu0
  %2412 = vmatprep.mubr.f32.mxu0 0.0
  %2413 = vmatmul.mubr.f32.gmra.mrb[0].mxu0 %v2331
  %v2414 = vpop.f32.mrb[0].mxu0
  %v2415 = vadd.f32 0.0, %v2414
  %v2416 = vpop.f32.mrb[0].mxu0
  %2417 = vdwg.mxu0
  %vm2418 = vcmask 130048
  %v2420 = vsel %vm2418, %v2400, 0
  %v2423 = vsel %vm2418, %v2405, 0
  %v2426 = vsel %vm2418, %v2410, 0
  %v2429 = vsel %vm2418, %v2415, 0
  %2431 = vmatprep.subr.mxu0 0.0
  %2432 = vmatpush1.msra.mxu0 %v78
  %2433 = vmatprep.subr.mxu0 0.0
  %2434 = vmatpush1.msra.mxu0 %v80
  %2435 = vmatprep.subr.mxu0 0.0
  %2436 = vmatpush1.msra.mxu0 0.0
  %2437 = vmatprep.subr.mxu0 0.0
  %2438 = vmatpush1.msra.mxu0 0.0
  %2439 = vmatprep.subr.mxu0 0.0
  %2440 = vmatpush1.msra.mxu0 0.0
  %2441 = vmatprep.subr.mxu0 0.0
  %2442 = vmatpush1.msra.mxu0 0.0
  %2443 = vmatprep.subr.mxu0 0.0
  %2444 = vmatpush1.msra.mxu0 0.0
  %2445 = vmatprep.subr.mxu0 0.0
  %2446 = vmatpush1.msra.mxu0 0.0
  %2447 = vmatprep.subr.mxu0 0.0
  %2448 = vmatpush1.msra.mxu0 0.0
  %2449 = vmatprep.subr.mxu0 0.0
  %2450 = vmatpush1.msra.mxu0 0.0
  %2451 = vmatprep.subr.mxu0 0.0
  %2452 = vmatpush1.msra.mxu0 0.0
  %2453 = vmatprep.subr.mxu0 0.0
  %2454 = vmatpush1.msra.mxu0 0.0
  %2455 = vmatprep.subr.mxu0 0.0
  %2456 = vmatpush1.msra.mxu0 0.0
  %2457 = vmatprep.subr.mxu0 0.0
  %2458 = vmatpush1.msra.mxu0 0.0
  %2459 = vmatprep.subr.mxu0 0.0
  %2460 = vmatpush1.msra.mxu0 0.0
  %2461 = vmatprep.subr.mxu0 0.0
  %2462 = vmatpush1.msra.mxu0 0.0
  %2463 = vmatprep.subr.mxu0 0.0
  %2464 = vmatpush1.msra.mxu0 0.0
  %2465 = vmatprep.subr.mxu0 0.0
  %2466 = vmatpush1.msra.mxu0 0.0
  %2467 = vmatprep.subr.mxu0 0.0
  %2468 = vmatpush1.msra.mxu0 0.0
  %2469 = vmatprep.subr.mxu0 0.0
  %2470 = vmatpush1.msra.mxu0 0.0
  %2471 = vmatprep.subr.mxu0 0.0
  %2472 = vmatpush1.msra.mxu0 0.0
  %2473 = vmatprep.subr.mxu0 0.0
  %2474 = vmatpush1.msra.mxu0 0.0
  %2475 = vmatprep.subr.mxu0 0.0
  %2476 = vmatpush1.msra.mxu0 0.0
  %2477 = vmatprep.subr.mxu0 0.0
  %2478 = vmatpush1.msra.mxu0 0.0
  %2479 = vmatprep.subr.mxu0 0.0
  %2480 = vmatpush1.msra.mxu0 0.0
  %2481 = vmatprep.subr.mxu0 0.0
  %2482 = vmatpush1.msra.mxu0 0.0
  %2483 = vmatprep.subr.mxu0 0.0
  %2484 = vmatpush1.msra.mxu0 0.0
  %2485 = vmatprep.subr.mxu0 0.0
  %2486 = vmatpush1.msra.mxu0 0.0
  %2487 = vmatprep.subr.mxu0 0.0
  %2488 = vmatpush1.msra.mxu0 0.0
  %2489 = vmatprep.subr.mxu0 0.0
  %2490 = vmatpush1.msra.mxu0 0.0
  %2491 = vmatprep.subr.mxu0 0.0
  %2492 = vmatpush1.msra.mxu0 0.0
  %2493 = vmatprep.subr.mxu0 0.0
  %2494 = vmatpush1.msra.mxu0 0.0
  %2495 = vmatprep.mubr.f32.mxu0 0.0
  %2496 = vmatmul.mubr.f32.gmra.mrb[0].mxu0 %v2420
  %v2497 = vpop.f32.mrb[0].mxu0
  %v2498 = vadd.f32 0.0, %v2497
  %v2499 = vpop.f32.mrb[0].mxu0
  %2500 = vmatprep.mubr.f32.mxu0 0.0
  %2501 = vmatmul.mubr.f32.gmra.mrb[0].mxu0 %v2423
  %v2502 = vpop.f32.mrb[0].mxu0
  %v2503 = vadd.f32 0.0, %v2502
  %v2504 = vpop.f32.mrb[0].mxu0
  %2505 = vmatprep.mubr.f32.mxu0 0.0
  %2506 = vmatmul.mubr.f32.gmra.mrb[0].mxu0 %v2426
  %v2507 = vpop.f32.mrb[0].mxu0
  %v2508 = vadd.f32 0.0, %v2507
  %v2509 = vpop.f32.mrb[0].mxu0
  %2510 = vmatprep.mubr.f32.mxu0 0.0
  %2511 = vmatmul.mubr.f32.gmra.mrb[0].mxu0 %v2429
  %v2512 = vpop.f32.mrb[0].mxu0
  %v2513 = vadd.f32 0.0, %v2512
  %v2514 = vpop.f32.mrb[0].mxu0
  %2515 = vdwg.mxu0
  %2516 = vset.pattern.permute.xlu0 42
  %2517 = vperm.xlu0 %2516, %v70
  %v2518 = vpop.permute.xlu0 %2517
  %2520 = vset.pattern.permute.xlu0 42
  %2521 = vperm.xlu0 %2520, %v72
  %v2522 = vpop.permute.xlu0 %2521
  %2524 = vset.pattern.permute.xlu0 42
  %2525 = vperm.xlu0 %2524, %v74
  %v2526 = vpop.permute.xlu0 %2525
  %2528 = vset.pattern.permute.xlu0 42
  %2529 = vperm.xlu0 %2528, %v76
  %v2530 = vpop.permute.xlu0 %2529
  %2532 = vrot.lane.b32.xlu0 %v69, 64
  %v2533 = vpop.permute.xlu0 %2532
  %2534 = vrot.lane.b32.xlu0 %v71, 64
  %v2535 = vpop.permute.xlu0 %2534
  %2536 = vrot.lane.b32.xlu0 %v73, 64
  %v2537 = vpop.permute.xlu0 %2536
  %2538 = vrot.lane.b32.xlu0 %v75, 64
  %v2539 = vpop.permute.xlu0 %2538
  %v2540 = vsel %vm131, %v2533, 0
  %v2542 = vsel %vm131, %v2535, 0
  %v2544 = vsel %vm131, %v2537, 0
  %v2546 = vsel %vm131, %v2539, 0
  %2548 = vmatprep.subr.mxu0 0.0
  %2549 = vmatpush1.msra.mxu0 %v2498
  %2550 = vmatprep.subr.mxu0 0.0
  %2551 = vmatpush1.msra.mxu0 %v2503
  %2552 = vmatprep.subr.mxu0 0.0
  %2553 = vmatpush1.msra.mxu0 %v2508
  %2554 = vmatprep.subr.mxu0 0.0
  %2555 = vmatpush1.msra.mxu0 %v2513
  %2556 = vmatprep.subr.mxu0 0.0
  %2557 = vmatpush1.msra.mxu0 0.0
  %2558 = vmatprep.subr.mxu0 0.0
  %2559 = vmatpush1.msra.mxu0 0.0
  %2560 = vmatprep.subr.mxu0 0.0
  %2561 = vmatpush1.msra.mxu0 0.0
  %2562 = vmatprep.subr.mxu0 0.0
  %2563 = vmatpush1.msra.mxu0 0.0
  %2564 = vmatprep.subr.mxu0 0.0
  %2565 = vmatpush1.msra.mxu0 0.0
  %2566 = vmatprep.subr.mxu0 0.0
  %2567 = vmatpush1.msra.mxu0 0.0
  %2568 = vmatprep.subr.mxu0 0.0
  %2569 = vmatpush1.msra.mxu0 0.0
  %2570 = vmatprep.subr.mxu0 0.0
  %2571 = vmatpush1.msra.mxu0 0.0
  %2572 = vmatprep.subr.mxu0 0.0
  %2573 = vmatpush1.msra.mxu0 0.0
  %2574 = vmatprep.subr.mxu0 0.0
  %2575 = vmatpush1.msra.mxu0 0.0
  %2576 = vmatprep.subr.mxu0 0.0
  %2577 = vmatpush1.msra.mxu0 0.0
  %2578 = vmatprep.subr.mxu0 0.0
  %2579 = vmatpush1.msra.mxu0 0.0
  %2580 = vmatprep.subr.mxu0 0.0
  %2581 = vmatpush1.msra.mxu0 0.0
  %2582 = vmatprep.subr.mxu0 0.0
  %2583 = vmatpush1.msra.mxu0 0.0
  %2584 = vmatprep.subr.mxu0 0.0
  %2585 = vmatpush1.msra.mxu0 0.0
  %2586 = vmatprep.subr.mxu0 0.0
  %2587 = vmatpush1.msra.mxu0 0.0
  %2588 = vmatprep.subr.mxu0 0.0
  %2589 = vmatpush1.msra.mxu0 0.0
  %2590 = vmatprep.subr.mxu0 0.0
  %2591 = vmatpush1.msra.mxu0 0.0
  %2592 = vmatprep.subr.mxu0 0.0
  %2593 = vmatpush1.msra.mxu0 0.0
  %2594 = vmatprep.subr.mxu0 0.0
  %2595 = vmatpush1.msra.mxu0 0.0
  %2596 = vmatprep.subr.mxu0 0.0
  %2597 = vmatpush1.msra.mxu0 0.0
  %2598 = vmatprep.subr.mxu0 0.0
  %2599 = vmatpush1.msra.mxu0 0.0
  %2600 = vmatprep.subr.mxu0 0.0
  %2601 = vmatpush1.msra.mxu0 0.0
  %2602 = vmatprep.subr.mxu0 0.0
  %2603 = vmatpush1.msra.mxu0 0.0
  %2604 = vmatprep.subr.mxu0 0.0
  %2605 = vmatpush1.msra.mxu0 0.0
  %2606 = vmatprep.subr.mxu0 0.0
  %2607 = vmatpush1.msra.mxu0 0.0
  %2608 = vmatprep.subr.mxu0 0.0
  %2609 = vmatpush1.msra.mxu0 0.0
  %2610 = vmatprep.subr.mxu0 0.0
  %2611 = vmatpush1.msra.mxu0 0.0
  %2612 = vmatprep.mubr.f32.mxu0 0.0
  %2613 = vmatmul.mubr.f32.gmra.mrb[0].mxu0 %v2540
  %v2614 = vpop.f32.mrb[0].mxu0
  %v2615 = vadd.f32 %v2518, %v2614
  %v2616 = vpop.f32.mrb[0].mxu0
  %2617 = vmatprep.mubr.f32.mxu0 0.0
  %2618 = vmatmul.mubr.f32.gmra.mrb[0].mxu0 %v2542
  %v2619 = vpop.f32.mrb[0].mxu0
  %v2620 = vadd.f32 %v2522, %v2619
  %v2621 = vpop.f32.mrb[0].mxu0
  %2622 = vmatprep.mubr.f32.mxu0 0.0
  %2623 = vmatmul.mubr.f32.gmra.mrb[0].mxu0 %v2544
  %v2624 = vpop.f32.mrb[0].mxu0
  %v2625 = vadd.f32 %v2526, %v2624
  %v2626 = vpop.f32.mrb[0].mxu0
  %2627 = vmatprep.mubr.f32.mxu0 0.0
  %2628 = vmatmul.mubr.f32.gmra.mrb[0].mxu0 %v2546
  %v2629 = vpop.f32.mrb[0].mxu0
  %v2630 = vadd.f32 %v2530, %v2629
  %v2631 = vpop.f32.mrb[0].mxu0
  %2632 = vdwg.mxu0
  %v2633 = vmax.f32 %v2615, 0.0
  %v2634 = vmax.f32 %v2620, 0.0
  %v2635 = vmax.f32 %v2625, 0.0
  %v2636 = vmax.f32 %v2630, 0.0
  %2637 = vset.pattern.permute.xlu0 43
  %2638 = vperm.xlu0 %2637, %v70
  %v2639 = vpop.permute.xlu0 %2638
  %2641 = vset.pattern.permute.xlu0 43
  %2642 = vperm.xlu0 %2641, %v72
  %v2643 = vpop.permute.xlu0 %2642
  %2645 = vset.pattern.permute.xlu0 43
  %2646 = vperm.xlu0 %2645, %v74
  %v2647 = vpop.permute.xlu0 %2646
  %2649 = vset.pattern.permute.xlu0 43
  %2650 = vperm.xlu0 %2649, %v76
  %v2651 = vpop.permute.xlu0 %2650
  %2653 = vrot.lane.b32.xlu0 %v69, 32
  %v2654 = vpop.permute.xlu0 %2653
  %2655 = vrot.lane.b32.xlu0 %v71, 32
  %v2656 = vpop.permute.xlu0 %2655
  %2657 = vrot.lane.b32.xlu0 %v73, 32
  %v2658 = vpop.permute.xlu0 %2657
  %2659 = vrot.lane.b32.xlu0 %v75, 32
  %v2660 = vpop.permute.xlu0 %2659
  %v2661 = vsel %vm131, %v2654, 0
  %v2663 = vsel %vm131, %v2656, 0
  %v2665 = vsel %vm131, %v2658, 0
  %v2667 = vsel %vm131, %v2660, 0
  %2669 = vmatprep.subr.mxu0 0.0
  %2670 = vmatpush1.msra.mxu0 %v2633
  %2671 = vmatprep.subr.mxu0 0.0
  %2672 = vmatpush1.msra.mxu0 %v2634
  %2673 = vmatprep.subr.mxu0 0.0
  %2674 = vmatpush1.msra.mxu0 %v2635
  %2675 = vmatprep.subr.mxu0 0.0
  %2676 = vmatpush1.msra.mxu0 %v2636
  %2677 = vmatprep.subr.mxu0 0.0
  %2678 = vmatpush1.msra.mxu0 0.0
  %2679 = vmatprep.subr.mxu0 0.0
  %2680 = vmatpush1.msra.mxu0 0.0
  %2681 = vmatprep.subr.mxu0 0.0
  %2682 = vmatpush1.msra.mxu0 0.0
  %2683 = vmatprep.subr.mxu0 0.0
  %2684 = vmatpush1.msra.mxu0 0.0
  %2685 = vmatprep.subr.mxu0 0.0
  %2686 = vmatpush1.msra.mxu0 0.0
  %2687 = vmatprep.subr.mxu0 0.0
  %2688 = vmatpush1.msra.mxu0 0.0
  %2689 = vmatprep.subr.mxu0 0.0
  %2690 = vmatpush1.msra.mxu0 0.0
  %2691 = vmatprep.subr.mxu0 0.0
  %2692 = vmatpush1.msra.mxu0 0.0
  %2693 = vmatprep.subr.mxu0 0.0
  %2694 = vmatpush1.msra.mxu0 0.0
  %2695 = vmatprep.subr.mxu0 0.0
  %2696 = vmatpush1.msra.mxu0 0.0
  %2697 = vmatprep.subr.mxu0 0.0
  %2698 = vmatpush1.msra.mxu0 0.0
  %2699 = vmatprep.subr.mxu0 0.0
  %2700 = vmatpush1.msra.mxu0 0.0
  %2701 = vmatprep.subr.mxu0 0.0
  %2702 = vmatpush1.msra.mxu0 0.0
  %2703 = vmatprep.subr.mxu0 0.0
  %2704 = vmatpush1.msra.mxu0 0.0
  %2705 = vmatprep.subr.mxu0 0.0
  %2706 = vmatpush1.msra.mxu0 0.0
  %2707 = vmatprep.subr.mxu0 0.0
  %2708 = vmatpush1.msra.mxu0 0.0
  %2709 = vmatprep.subr.mxu0 0.0
  %2710 = vmatpush1.msra.mxu0 0.0
  %2711 = vmatprep.subr.mxu0 0.0
  %2712 = vmatpush1.msra.mxu0 0.0
  %2713 = vmatprep.subr.mxu0 0.0
  %2714 = vmatpush1.msra.mxu0 0.0
  %2715 = vmatprep.subr.mxu0 0.0
  %2716 = vmatpush1.msra.mxu0 0.0
  %2717 = vmatprep.subr.mxu0 0.0
  %2718 = vmatpush1.msra.mxu0 0.0
  %2719 = vmatprep.subr.mxu0 0.0
  %2720 = vmatpush1.msra.mxu0 0.0
  %2721 = vmatprep.subr.mxu0 0.0
  %2722 = vmatpush1.msra.mxu0 0.0
  %2723 = vmatprep.subr.mxu0 0.0
  %2724 = vmatpush1.msra.mxu0 0.0
  %2725 = vmatprep.subr.mxu0 0.0
  %2726 = vmatpush1.msra.mxu0 0.0
  %2727 = vmatprep.subr.mxu0 0.0
  %2728 = vmatpush1.msra.mxu0 0.0
  %2729 = vmatprep.subr.mxu0 0.0
  %2730 = vmatpush1.msra.mxu0 0.0
  %2731 = vmatprep.subr.mxu0 0.0
  %2732 = vmatpush1.msra.mxu0 0.0
  %2733 = vmatprep.mubr.f32.mxu0 0.0
  %2734 = vmatmul.mubr.f32.gmra.mrb[0].mxu0 %v2661
  %v2735 = vpop.f32.mrb[0].mxu0
  %v2736 = vadd.f32 %v2639, %v2735
  %v2737 = vpop.f32.mrb[0].mxu0
  %2738 = vmatprep.mubr.f32.mxu0 0.0
  %2739 = vmatmul.mubr.f32.gmra.mrb[0].mxu0 %v2663
  %v2740 = vpop.f32.mrb[0].mxu0
  %v2741 = vadd.f32 %v2643, %v2740
  %v2742 = vpop.f32.mrb[0].mxu0
  %2743 = vmatprep.mubr.f32.mxu0 0.0
  %2744 = vmatmul.mubr.f32.gmra.mrb[0].mxu0 %v2665
  %v2745 = vpop.f32.mrb[0].mxu0
  %v2746 = vadd.f32 %v2647, %v2745
  %v2747 = vpop.f32.mrb[0].mxu0
  %2748 = vmatprep.mubr.f32.mxu0 0.0
  %2749 = vmatmul.mubr.f32.gmra.mrb[0].mxu0 %v2667
  %v2750 = vpop.f32.mrb[0].mxu0
  %v2751 = vadd.f32 %v2651, %v2750
  %v2752 = vpop.f32.mrb[0].mxu0
  %2753 = vdwg.mxu0
  %v2754 = vxor.u32 %v2736, 2147483648
  %v2755 = vxor.u32 %v2741, 2147483648
  %v2756 = vxor.u32 %v2746, 2147483648
  %v2757 = vxor.u32 %v2751, 2147483648
  %v2758 = vmul.f32 %v2754, 1.442695
  %v2759 = vpow.pop %v2758
  %v2760 = vmul.f32 %v2755, 1.442695
  %v2761 = vpow.pop %v2760
  %v2762 = vmul.f32 %v2756, 1.442695
  %v2763 = vpow.pop %v2762
  %v2764 = vmul.f32 %v2757, 1.442695
  %v2765 = vpow.pop %v2764
  %v2766 = vadd.f32 %v2759, 1.0
  %v2767 = vadd.f32 %v2761, 1.0
  %v2768 = vadd.f32 %v2763, 1.0
  %v2769 = vadd.f32 %v2765, 1.0
  %v2770 = vrcp.pop %v2766
  %v2771 = vmul.f32 1.0, %v2770
  %v2772 = vrcp.pop %v2767
  %v2773 = vmul.f32 1.0, %v2772
  %v2774 = vrcp.pop %v2768
  %v2775 = vmul.f32 1.0, %v2774
  %v2776 = vrcp.pop %v2769
  %v2777 = vmul.f32 1.0, %v2776
  %v2778 = vmul.f32 %v2400, %v2771
  %v2779 = vmul.f32 %v2405, %v2773
  %v2780 = vmul.f32 %v2410, %v2775
  %v2781 = vmul.f32 %v2415, %v2777
  %v2782 = vadd.f32 %v2778, %v1485
  %v2783 = vadd.f32 %v2779, %v1490
  %v2784 = vadd.f32 %v2780, %v1495
  %v2785 = vadd.f32 %v2781, %v1500
  %2786 = vst.msk [vmem:[%s4] sm:$0xff] %vm2418, %v2782
  %2787 = vst.msk [vmem:[%s4 + $0x8] sm:$0xff] %vm2418, %v2783
  %2788 = vst.msk [vmem:[%s4 + $0x10] sm:$0xff] %vm2418, %v2784
  %2789 = vst.msk [vmem:[%s4 + $0x18] sm:$0xff] %vm2418, %v2785
  // Predicated region
  $region18: #{tpu_custom_call.1} parent=0 // pred_check
    _
  $region19: #{tpu_custom_call.1} parent=0 // pred_check_branch
    %2791 = sbr.rel (0) target = $region21
  $region20: #{tpu_custom_call.1} parent=0 // pred_region
    _
  $region21: #{tpu_custom_call.1} parent=0 // pred_fallthru
    _
  // Predicated region
  $region22: #{tpu_custom_call.1} parent=0 // pred_check
    _
  $region23: #{tpu_custom_call.1} parent=0 // pred_check_branch
    %2793 = sbr.rel (0) target = $region25
  $region24: #{tpu_custom_call.1} parent=0 // pred_region
    _
  $region25: #{tpu_custom_call.1} parent=0 // pred_fallthru
    _

</llo_original>
